<compile_context>
chip_gen: v7x
topology: tpu7x:2x2x1
jax: 0.10.0
libtpu: 0.0.40
codegen_flags: <defaults>
</compile_context>

<pallas_src>
import jax
import jax.numpy as jnp
from jax.experimental import pallas as pl
from jax.experimental.pallas import tpu as pltpu

LANE = 128
HIDDEN = [16, 64, 64, 16, 1]   # MLP widths: 1 -> 16 -> 64 -> 64 -> 16 -> 1
STATE_DIM = 1
MAX_WIDE = 8192                # samples per grid step (lane axis), 32 KiB per in/out buffer


def _round_up(n, m):
    return -(-n // m) * m


def _round8(n):
    return _round_up(n, 8)


def _build_offsets():
    """Row layout of the parameter pack (features on sublanes, 8-aligned offsets)."""
    dims = [STATE_DIM] + list(HIDDEN)
    offs = {}
    row = 0
    for li, out_d in enumerate(HIDDEN):
        in_d = dims[li]
        w_rows = out_d if li < len(HIDDEN) - 1 else in_d   # last layer stored transposed (in, out)
        offs[f"w{li}"] = row
        row += _round8(w_rows)
        offs[f"b{li}"] = row
        row += _round8(out_d)
    offs["pa"] = row            # parametric slope a
    row += 8
    offs["pc"] = row            # parametric offset c
    row += 8
    return offs, row


_OFFS, P_ROWS = _build_offsets()


# ----------------------------------------------------------------------------- kernel


def _combine_kernel(x_ref, p_ref, o_ref):
    """Fused  a*x + c + MLP(x)  on one lane-wide block of samples.

    x_ref/o_ref: (1, WIDE) f32 — WIDE samples on the lane axis.
    p_ref:       (P_ROWS, 128) f32 — packed weights/biases + parametric (a, c).
    """
    h0, h1, h2, h3, _ = HIDDEN
    f32 = jnp.float32

    x = x_ref[...]                                            # (1, WIDE)

    # layer 0: K == 1 -> VPU broadcast multiply-add (skip the MXU entirely)
    w0 = p_ref[pl.ds(_OFFS["w0"], h0), pl.ds(0, STATE_DIM)]   # (16, 1)
    b0 = p_ref[pl.ds(_OFFS["b0"], h0), pl.ds(0, 1)]           # (16, 1)
    h = jnp.maximum(w0 * x + b0, 0.0)                         # (16, WIDE)

    # middle layers: ONE lane-wide MXU matmul per layer: (out, in) @ (in, WIDE)
    w1 = p_ref[pl.ds(_OFFS["w1"], h1), pl.ds(0, h0)]          # (64, 16)
    b1 = p_ref[pl.ds(_OFFS["b1"], h1), pl.ds(0, 1)]           # (64, 1)
    h = jnp.maximum(jnp.dot(w1, h, preferred_element_type=f32) + b1, 0.0)   # (64, WIDE)

    w2 = p_ref[pl.ds(_OFFS["w2"], h2), pl.ds(0, h1)]          # (64, 64)
    b2 = p_ref[pl.ds(_OFFS["b2"], h2), pl.ds(0, 1)]           # (64, 1)
    h = jnp.maximum(jnp.dot(w2, h, preferred_element_type=f32) + b2, 0.0)   # (64, WIDE)

    w3 = p_ref[pl.ds(_OFFS["w3"], h3), pl.ds(0, h2)]          # (16, 64)
    b3 = p_ref[pl.ds(_OFFS["b3"], h3), pl.ds(0, 1)]           # (16, 1)
    h = jnp.maximum(jnp.dot(w3, h, preferred_element_type=f32) + b3, 0.0)   # (16, WIDE)

    # last layer: N == 1 -> VPU multiply + one sublane reduce (lane-full result)
    w4 = p_ref[pl.ds(_OFFS["w4"], h3), pl.ds(0, 1)]           # (16, 1)  stored transposed
    b4 = p_ref[pl.ds(_OFFS["b4"], 1), pl.ds(0, 1)]            # (1, 1)
    y = jnp.sum(w4 * h, axis=0, keepdims=True) + b4           # (1, WIDE)

    # fused combine: para(x) + nonpara(x); lane-dense store
    pa = p_ref[pl.ds(_OFFS["pa"], 1), pl.ds(0, 1)]            # (1, 1)   parametric slope
    pc = p_ref[pl.ds(_OFFS["pc"], 1), pl.ds(0, 1)]            # (1, 1)   parametric offset
    o_ref[...] = pa * x + pc + y


# --------------------------------------------------------------------------- wrappers


def _make_params(key, state_dim=STATE_DIM, hidden=HIDDEN):
    """Xavier-normal weights (PyTorch nn.Linear convention: W (out, in)), zero biases."""
    dims = [state_dim] + list(hidden)
    params = []
    for i, out_d in enumerate(hidden):
        in_d = dims[i]
        key, sub = jax.random.split(key)
        std = (2.0 / (in_d + out_d)) ** 0.5
        w = std * jax.random.normal(sub, (out_d, in_d), dtype=jnp.float32)
        b = jnp.zeros((out_d,), dtype=jnp.float32)
        params.append((w, b))
    return params


def pack_model(nonpara_params, para_a, para_c):
    """Pack MLP weights (features on sublanes) + parametric (a, c) into one (P_ROWS, 128) slab."""
    pack = jnp.zeros((P_ROWS, LANE), dtype=jnp.float32)
    n = len(nonpara_params)
    for li, (w, b) in enumerate(nonpara_params):
        out_d, in_d = w.shape
        r = _OFFS[f"w{li}"]
        if li == n - 1:
            # last layer stored transposed (in, out): used as a VPU multiply + reduce
            pack = pack.at[r:r + in_d, :out_d].set(w.T.astype(jnp.float32))
        else:
            pack = pack.at[r:r + out_d, :in_d].set(w.astype(jnp.float32))
        rb = _OFFS[f"b{li}"]
        pack = pack.at[rb:rb + out_d, 0].set(b.astype(jnp.float32))
    pack = pack.at[_OFFS["pa"], 0].set(jnp.asarray(para_a, jnp.float32))
    pack = pack.at[_OFFS["pc"], 0].set(jnp.asarray(para_c, jnp.float32))
    return pack


def _pick_wide(n):
    """Block width: multiple of 1024, <= MAX_WIDE, and >= 2 grid steps when possible (v7x)."""
    n1 = _round_up(max(n, 1), 1024)
    if n1 <= 1024:
        return 1024
    return min(MAX_WIDE, _round_up(n1 // 2, 1024))


def _combine_rows(x_flat, pack):
    """y[i] = a*x[i] + c + MLP(x[i]) for a flat vector x."""
    n = x_flat.shape[0]
    wide = _pick_wide(n)
    n_pad = _round_up(n, wide)
    xp = x_flat.astype(jnp.float32)
    if n_pad != n:                      # copies only when N is not block-aligned
        xp = jnp.pad(xp, (0, n_pad - n))
    g = n_pad // wide
    x3 = xp.reshape(g, 1, wide)

    y3 = pl.pallas_call(
        _combine_kernel,
        out_shape=jax.ShapeDtypeStruct((g, 1, wide), jnp.float32),
        grid_spec=pltpu.PrefetchScalarGridSpec(
            num_scalar_prefetch=0,
            grid=(g,),
            in_specs=[
                pl.BlockSpec((None, 1, wide), lambda i: (i, 0, 0)),   # lane-wide sample row
                pl.BlockSpec((P_ROWS, LANE), lambda i: (0, 0)),       # constant-index weight pack
            ],
            out_specs=pl.BlockSpec((None, 1, wide), lambda i: (i, 0, 0)),
        ),
        compiler_params=pltpu.CompilerParams(
            dimension_semantics=("parallel",),
            vmem_limit_bytes=32 * 1024 * 1024),
    )(x3, pack)

    y = y3.reshape(n_pad)
    if n_pad != n:
        y = y[:n]
    return y


@jax.jit
def _combine_nd(state, pack):
    # state_dim == 1 -> the original module's permutes are pure reshapes, so a flat
    # reshape is exact (no transpose copies, no extra HBM passes).
    y = _combine_rows(state.reshape(-1), pack)
    return y.reshape(state.shape).astype(state.dtype)


def derivation_combine_forward(t, state, pack, mode="combine"):
    """DerivationCombineModel.forward(t, state)."""
    del t  # unused, matches the PyTorch signature
    pa = pack[_OFFS["pa"], 0]
    pc = pack[_OFFS["pc"], 0]
    if mode is None:
        return pa * state + pc                       # para_model only (trivial, no kernel)
    if state.ndim in (3, 4):
        assert state.shape[-2] == STATE_DIM, "state_dim axis must be 1"
        return _combine_nd(state, pack)              # fused para + nonpara Pallas kernel
    # NonParametricModel.forward leaves other ranks untouched -> combine = para + identity
    return pa * state + pc + state


# --------------------------------------------------------------------------- reference


def _reference_forward(t, state, params, para_a, para_c, mode):
    """Pure-JAX reference mirroring the PyTorch module."""
    del t
    para = para_a * state + para_c
    if mode is None:
        return para
    if state.ndim not in (3, 4):
        return para + state
    x = state.reshape(-1, 1).astype(jnp.float32)
    for i, (w, b) in enumerate(params):
        x = x @ w.T + b
        if i < len(params) - 1:
            x = jnp.maximum(x, 0.0)
    return para + x.reshape(state.shape)


if __name__ == "__main__":
    key = jax.random.PRNGKey(0)
    kp, kx3, kx4, kxl = jax.random.split(key, 4)
    params = _make_params(kp)
    para_a, para_c = 0.5, -0.25
    pack = pack_model(params, para_a, para_c)

    t = jnp.float32(0.0)

    # 4-D state: (batch=2, time=3, state_dim=1, h=16)
    x4 = jax.random.normal(kx4, (2, 3, 1, 16), dtype=jnp.float32)
    y4 = jax.block_until_ready(derivation_combine_forward(t, x4, pack, mode="combine"))
    assert y4.shape == x4.shape

    # 3-D state: (batch=2, state_dim=1, h=16)
    x3 = jax.random.normal(kx3, (2, 1, 16), dtype=jnp.float32)
    y3 = jax.block_until_ready(derivation_combine_forward(t, x3, pack, mode="combine"))
    assert y3.shape == x3.shape

    # larger case: exercises a multi-step grid (4096 samples -> 2 blocks of 2048)
    xl = jax.random.normal(kxl, (4, 8, 1, 128), dtype=jnp.float32)
    yl = jax.block_until_ready(derivation_combine_forward(t, xl, pack, mode="combine"))
    assert yl.shape == xl.shape

    # mode=None path: parametric part only
    yn = jax.block_until_ready(derivation_combine_forward(t, x3, pack, mode=None))

    # correctness vs pure-JAX reference
    ref4 = _reference_forward(t, x4, params, para_a, para_c, "combine")
    ref3 = _reference_forward(t, x3, params, para_a, para_c, "combine")
    refl = _reference_forward(t, xl, params, para_a, para_c, "combine")
    refn = _reference_forward(t, x3, params, para_a, para_c, None)
    assert jnp.allclose(y4, ref4, atol=1e-4, rtol=1e-4)
    assert jnp.allclose(y3, ref3, atol=1e-4, rtol=1e-4)
    assert jnp.allclose(yl, refl, atol=1e-4, rtol=1e-4)
    assert jnp.allclose(yn, refn, atol=1e-5, rtol=1e-5)

    print("KERNEL_OK")
</pallas_src>

<mosaic_0001>
module attributes {stable_mosaic.version = 11 : i64} {
  func.func @_combine_kernel(%arg0: i32, %arg1: memref<1x1x1024xf32, #tpu.memory_space<vmem>>, %arg2: memref<360x128xf32, #tpu.memory_space<vmem>>, %arg3: memref<1x1x1024xf32, #tpu.memory_space<vmem>>) attributes {dimension_semantics = [#tpu.dimension_semantics<parallel>], iteration_bounds = array<i64: 1>, scalar_prefetch = 0 : i64, scratch_operands = 0 : i64, tpu.core_type = #tpu.core_type<tc>, window_params = [{transform_indices = @transform_0, window_bounds = array<i64: 1, 1, 1024>}, {pipeline_mode = #tpu.pipeline_mode<synchronous>, transform_indices = @transform_1, window_bounds = array<i64: 360, 128>}, {transform_indices = @transform_2, window_bounds = array<i64: 1, 1, 1024>}]} {
    %c0 = arith.constant 0 : index
    %c0_0 = arith.constant 0 : index
    %c0_1 = arith.constant 0 : index
    %0 = vector.load %arg1[%c0, %c0_0, %c0_1] : memref<1x1x1024xf32, #tpu.memory_space<vmem>>, vector<1x1x1024xf32>
    %1 = vector.shape_cast %0 : vector<1x1x1024xf32> to vector<1x1024xf32>
    %c0_2 = arith.constant 0 : index
    %c0_3 = arith.constant 0 : index
    %2 = vector.load %arg2[%c0_2, %c0_3] : memref<360x128xf32, #tpu.memory_space<vmem>>, vector<16x1xf32>
    %c16 = arith.constant 16 : index
    %c0_4 = arith.constant 0 : index
    %3 = vector.load %arg2[%c16, %c0_4] : memref<360x128xf32, #tpu.memory_space<vmem>>, vector<16x1xf32>
    %4 = vector.broadcast %2 : vector<16x1xf32> to vector<16x1024xf32>
    %5 = vector.broadcast %1 : vector<1x1024xf32> to vector<16x1024xf32>
    %6 = arith.mulf %4, %5 : vector<16x1024xf32>
    %7 = vector.broadcast %3 : vector<16x1xf32> to vector<16x1024xf32>
    %8 = arith.addf %6, %7 : vector<16x1024xf32>
    %cst = arith.constant 0.000000e+00 : f32
    %9 = vector.broadcast %cst : f32 to vector<16x1024xf32>
    %10 = arith.maximumf %8, %9 : vector<16x1024xf32>
    %c32 = arith.constant 32 : index
    %c0_5 = arith.constant 0 : index
    %11 = vector.load %arg2[%c32, %c0_5] : memref<360x128xf32, #tpu.memory_space<vmem>>, vector<64x16xf32>
    %c96 = arith.constant 96 : index
    %c0_6 = arith.constant 0 : index
    %12 = vector.load %arg2[%c96, %c0_6] : memref<360x128xf32, #tpu.memory_space<vmem>>, vector<64x1xf32>
    %cst_7 = arith.constant dense<0.000000e+00> : vector<64x1024xf32>
    %13 = tpu.matmul %11, %10, %cst_7 {dimension_numbers = #tpu.dot_dimension_numbers<[1], [0], [0], [1], [0, 0, 1, 1], [], []>} : vector<64x16xf32>, vector<16x1024xf32>, vector<64x1024xf32> -> vector<64x1024xf32>
    %14 = vector.broadcast %12 : vector<64x1xf32> to vector<64x1024xf32>
    %15 = arith.addf %13, %14 : vector<64x1024xf32>
    %cst_8 = arith.constant 0.000000e+00 : f32
    %16 = vector.broadcast %cst_8 : f32 to vector<64x1024xf32>
    %17 = arith.maximumf %15, %16 : vector<64x1024xf32>
    %c160 = arith.constant 160 : index
    %c0_9 = arith.constant 0 : index
    %18 = vector.load %arg2[%c160, %c0_9] : memref<360x128xf32, #tpu.memory_space<vmem>>, vector<64x64xf32>
    %c224 = arith.constant 224 : index
    %c0_10 = arith.constant 0 : index
    %19 = vector.load %arg2[%c224, %c0_10] : memref<360x128xf32, #tpu.memory_space<vmem>>, vector<64x1xf32>
    %cst_11 = arith.constant dense<0.000000e+00> : vector<64x1024xf32>
    %20 = tpu.matmul %18, %17, %cst_11 {dimension_numbers = #tpu.dot_dimension_numbers<[1], [0], [0], [1], [0, 0, 1, 1], [], []>} : vector<64x64xf32>, vector<64x1024xf32>, vector<64x1024xf32> -> vector<64x1024xf32>
    %21 = vector.broadcast %19 : vector<64x1xf32> to vector<64x1024xf32>
    %22 = arith.addf %20, %21 : vector<64x1024xf32>
    %cst_12 = arith.constant 0.000000e+00 : f32
    %23 = vector.broadcast %cst_12 : f32 to vector<64x1024xf32>
    %24 = arith.maximumf %22, %23 : vector<64x1024xf32>
    %c288 = arith.constant 288 : index
    %c0_13 = arith.constant 0 : index
    %25 = vector.load %arg2[%c288, %c0_13] : memref<360x128xf32, #tpu.memory_space<vmem>>, vector<16x64xf32>
    %c304 = arith.constant 304 : index
    %c0_14 = arith.constant 0 : index
    %26 = vector.load %arg2[%c304, %c0_14] : memref<360x128xf32, #tpu.memory_space<vmem>>, vector<16x1xf32>
    %cst_15 = arith.constant dense<0.000000e+00> : vector<16x1024xf32>
    %27 = tpu.matmul %25, %24, %cst_15 {dimension_numbers = #tpu.dot_dimension_numbers<[1], [0], [0], [1], [0, 0, 1, 1], [], []>} : vector<16x64xf32>, vector<64x1024xf32>, vector<16x1024xf32> -> vector<16x1024xf32>
    %28 = vector.broadcast %26 : vector<16x1xf32> to vector<16x1024xf32>
    %29 = arith.addf %27, %28 : vector<16x1024xf32>
    %cst_16 = arith.constant 0.000000e+00 : f32
    %30 = vector.broadcast %cst_16 : f32 to vector<16x1024xf32>
    %31 = arith.maximumf %29, %30 : vector<16x1024xf32>
    %c320 = arith.constant 320 : index
    %c0_17 = arith.constant 0 : index
    %32 = vector.load %arg2[%c320, %c0_17] : memref<360x128xf32, #tpu.memory_space<vmem>>, vector<16x1xf32>
    %c336 = arith.constant 336 : index
    %c0_18 = arith.constant 0 : index
    %33 = vector.load %arg2[%c336, %c0_18] : memref<360x128xf32, #tpu.memory_space<vmem>>, vector<1x1xf32>
    %34 = vector.broadcast %32 : vector<16x1xf32> to vector<16x1024xf32>
    %35 = arith.mulf %34, %31 : vector<16x1024xf32>
    %cst_19 = arith.constant dense<0.000000e+00> : vector<1024xf32>
    %36 = vector.multi_reduction <add>, %35, %cst_19 [0] : vector<16x1024xf32> to vector<1024xf32>
    %37 = vector.shape_cast %36 : vector<1024xf32> to vector<1x1024xf32>
    %38 = vector.broadcast %33 : vector<1x1xf32> to vector<1x1024xf32>
    %39 = arith.addf %37, %38 : vector<1x1024xf32>
    %c344 = arith.constant 344 : index
    %c0_20 = arith.constant 0 : index
    %40 = vector.load %arg2[%c344, %c0_20] : memref<360x128xf32, #tpu.memory_space<vmem>>, vector<1x1xf32>
    %c352 = arith.constant 352 : index
    %c0_21 = arith.constant 0 : index
    %41 = vector.load %arg2[%c352, %c0_21] : memref<360x128xf32, #tpu.memory_space<vmem>>, vector<1x1xf32>
    %42 = vector.broadcast %40 : vector<1x1xf32> to vector<1x1024xf32>
    %43 = arith.mulf %42, %1 : vector<1x1024xf32>
    %44 = vector.broadcast %41 : vector<1x1xf32> to vector<1x1024xf32>
    %45 = arith.addf %43, %44 : vector<1x1024xf32>
    %46 = arith.addf %45, %39 : vector<1x1024xf32>
    %c0_22 = arith.constant 0 : index
    %c0_23 = arith.constant 0 : index
    %c0_24 = arith.constant 0 : index
    %47 = vector.load %arg3[%c0_22, %c0_23, %c0_24] : memref<1x1x1024xf32, #tpu.memory_space<vmem>>, vector<1x1x1024xf32>
    %48 = vector.shape_cast %47 : vector<1x1x1024xf32> to vector<1x1024xf32>
    %49 = vector.shape_cast %46 : vector<1x1024xf32> to vector<1x1x1024xf32>
    tpu.vector_store %arg3[%c0_22, %c0_23, %c0_24], %49 {strides = array<i32>} : memref<1x1x1024xf32, #tpu.memory_space<vmem>>, vector<1x1x1024xf32>,
    return
  }
  func.func @transform_0(%arg0: i32) -> (i32, i32, i32) {
    %c0_i32 = arith.constant 0 : i32
    %c0_i32_0 = arith.constant 0 : i32
    %c0_i32_1 = arith.constant 0 : i32
    return %arg0, %c0_i32, %c0_i32_0 : i32, i32, i32
  }
  func.func @transform_1(%arg0: i32) -> (i32, i32) {
    %c0_i32 = arith.constant 0 : i32
    %c0_i32_0 = arith.constant 0 : i32
    %c0_i32_1 = arith.constant 0 : i32
    return %c0_i32, %c0_i32_0 : i32, i32
  }
  func.func @transform_2(%arg0: i32) -> (i32, i32, i32) {
    %c0_i32 = arith.constant 0 : i32
    %c0_i32_0 = arith.constant 0 : i32
    %c0_i32_1 = arith.constant 0 : i32
    return %arg0, %c0_i32, %c0_i32_0 : i32, i32, i32
  }
}

</mosaic_0001>

<llo_original>
// kernel: _combine_nd.1
$region0: #{_combine_nd.1}
  #allocation0 [shape = 'u32[]', space=smem, size = 0x4, offset = 0x4, fixed_abs, tag = 'smem constant byte address 0x4 - core index']
  #allocation1 [shape = 'u32[144,128]{1,0:T(1,128)}', space=vmem, size = 0x12000, scoped, tag = 'internal scratch']
  %s0 = inlined_call_operand.vmem [shape: f32[1,1,1024], index: 0, kind: input, shape index: {}]
  %s1 = inlined_call_operand.hbm [shape: f32[360,128], index: 1, kind: input, shape index: {}]
  %s2 = inlined_call_operand.vmem [shape: f32[1,1,1024], index: 2, kind: output, shape index: {}]
  %s3 = sld [smem:[#allocation0]]
  $region22: #{_combine_nd.1} parent=0
    _
  %s5 = ssub.s32 1, %s3
  %s6 = scalar_select 0, %s5, %s3
  $region1: #{_combine_nd.1} parent=0
    #allocation2 [shape = 'u8[184320]{0}', space=vmem, size = 0x2d000, scoped, tag = 'input window, operand 1, single buffered']
    #allocation3 [shape = 's32[1]{0}', space=sflag, size = 0x4, scoped, tag = 'scoped memory for _combine_nd.1']
    %7 = vsyncpa [#allocation3], 0
    // Predicated region
    $region2: #{_combine_nd.1} parent=1 // pred_check
      _
    $region3: #{_combine_nd.1} parent=1 // pred_check_branch
      %9 = sbr.rel (0) target = $region5
    $region4: #{_combine_nd.1} parent=1 // pred_region
      _
    $region5: #{_combine_nd.1} parent=1 // pred_fallthru
      _
    // Predicated region
    $region6: #{_combine_nd.1} parent=1 // pred_check
      _
    $region7: #{_combine_nd.1} parent=1 // pred_check_branch
      %11 = sbr.rel (0) target = $region9
    $region8: #{_combine_nd.1} parent=1 // pred_region
      %s13 = ssub.s32 5760, 5760
      %14 = vsyncadd [#allocation3], %s13
      %s15 = sshll.u32 [#allocation2], 4
      %s16 = int_to_ptr.vmem [resolvable:$true] %s15
      %21 = dma.hbm_to_vmem [thread:$0]  %s1, 5760, %s16, [#allocation3], 128, 128, 8
    $region9: #{_combine_nd.1} parent=1 // pred_fallthru
      _
    // Predicated region
    $region10: #{_combine_nd.1} parent=1 // pred_check
      _
    $region11: #{_combine_nd.1} parent=1 // pred_check_branch
      %23 = sbr.rel (0) target = $region13
    $region12: #{_combine_nd.1} parent=1 // pred_region
      %24 = dma.done [#allocation3], 5760
    $region13: #{_combine_nd.1} parent=1 // pred_fallthru
      _
    %v25 = vld [vmem:[%s0] sm:$0xff]
    %v26 = vld [vmem:[#allocation2] sm:$0xff]
    %v27 = vld [vmem:[#allocation2 + $0x8] sm:$0xff]
    %v28 = vld [vmem:[#allocation2 + $0x10] sm:$0xff]
    %v29 = vld [vmem:[#allocation2 + $0x18] sm:$0xff]
    %31 = vset.pattern.permute.xlu0 0
    %32 = vperm.xlu0 %31, %v26
    %v33 = vpop.permute.xlu0 %32
    %36 = vset.pattern.permute.xlu0 0
    %37 = vperm.xlu0 %36, %v27
    %v38 = vpop.permute.xlu0 %37
    %v41 = vlaneseq
    %v42 = vshrl.u32 %v41, 7
    %v43 = vsub.s32 0, %v42
    %v44 = vrot.slane %v25, %v43
    %v45 = vlaneseq
    %v46 = vshrl.u32 %v45, 7
    %v47 = vsub.s32 1, %v46
    %v48 = vrot.slane %v25, %v47
    %v49 = vlaneseq
    %v50 = vshrl.u32 %v49, 7
    %v51 = vsub.s32 2, %v50
    %v52 = vrot.slane %v25, %v51
    %v53 = vlaneseq
    %v54 = vshrl.u32 %v53, 7
    %v55 = vsub.s32 3, %v54
    %v56 = vrot.slane %v25, %v55
    %v57 = vlaneseq
    %v58 = vshrl.u32 %v57, 7
    %v59 = vsub.s32 4, %v58
    %v60 = vrot.slane %v25, %v59
    %v61 = vlaneseq
    %v62 = vshrl.u32 %v61, 7
    %v63 = vsub.s32 5, %v62
    %v64 = vrot.slane %v25, %v63
    %v65 = vlaneseq
    %v66 = vshrl.u32 %v65, 7
    %v67 = vsub.s32 6, %v66
    %v68 = vrot.slane %v25, %v67
    %v69 = vlaneseq
    %v70 = vshrl.u32 %v69, 7
    %v71 = vsub.s32 7, %v70
    %v72 = vrot.slane %v25, %v71
    %v81 = vmul.f32 %v33, %v44
    %v82 = vmul.f32 %v33, %v48
    %v83 = vmul.f32 %v33, %v52
    %v84 = vmul.f32 %v33, %v56
    %v85 = vmul.f32 %v33, %v60
    %v86 = vmul.f32 %v33, %v64
    %v87 = vmul.f32 %v33, %v68
    %v88 = vmul.f32 %v33, %v72
    %v89 = vmul.f32 %v38, %v44
    %v90 = vmul.f32 %v38, %v48
    %v91 = vmul.f32 %v38, %v52
    %v92 = vmul.f32 %v38, %v56
    %v93 = vmul.f32 %v38, %v60
    %v94 = vmul.f32 %v38, %v64
    %v95 = vmul.f32 %v38, %v68
    %v96 = vmul.f32 %v38, %v72
    %98 = vset.pattern.permute.xlu0 0
    %99 = vperm.xlu0 %98, %v28
    %v100 = vpop.permute.xlu0 %99
    %103 = vset.pattern.permute.xlu0 0
    %104 = vperm.xlu0 %103, %v29
    %v105 = vpop.permute.xlu0 %104
    %v107 = vadd.f32 %v81, %v100
    %v108 = vadd.f32 %v82, %v100
    %v109 = vadd.f32 %v83, %v100
    %v110 = vadd.f32 %v84, %v100
    %v111 = vadd.f32 %v85, %v100
    %v112 = vadd.f32 %v86, %v100
    %v113 = vadd.f32 %v87, %v100
    %v114 = vadd.f32 %v88, %v100
    %v115 = vadd.f32 %v89, %v105
    %v116 = vadd.f32 %v90, %v105
    %v117 = vadd.f32 %v91, %v105
    %v118 = vadd.f32 %v92, %v105
    %v119 = vadd.f32 %v93, %v105
    %v120 = vadd.f32 %v94, %v105
    %v121 = vadd.f32 %v95, %v105
    %v122 = vadd.f32 %v96, %v105
    %v123 = vmax.f32 %v107, 0.0
    %v124 = vmax.f32 %v108, 0.0
    %v125 = vmax.f32 %v109, 0.0
    %v126 = vmax.f32 %v110, 0.0
    %v127 = vmax.f32 %v111, 0.0
    %v128 = vmax.f32 %v112, 0.0
    %v129 = vmax.f32 %v113, 0.0
    %v130 = vmax.f32 %v114, 0.0
    %v131 = vmax.f32 %v115, 0.0
    %v132 = vmax.f32 %v116, 0.0
    %v133 = vmax.f32 %v117, 0.0
    %v134 = vmax.f32 %v118, 0.0
    %v135 = vmax.f32 %v119, 0.0
    %v136 = vmax.f32 %v120, 0.0
    %v137 = vmax.f32 %v121, 0.0
    %v138 = vmax.f32 %v122, 0.0
    %v139 = vld [vmem:[#allocation2 + $0x20] sm:$0xff]
    %v140 = vld [vmem:[#allocation2 + $0x28] sm:$0xff]
    %v141 = vld [vmem:[#allocation2 + $0x30] sm:$0xff]
    %v142 = vld [vmem:[#allocation2 + $0x38] sm:$0xff]
    %v143 = vld [vmem:[#allocation2 + $0x40] sm:$0xff]
    %v144 = vld [vmem:[#allocation2 + $0x48] sm:$0xff]
    %v145 = vld [vmem:[#allocation2 + $0x50] sm:$0xff]
    %v146 = vld [vmem:[#allocation2 + $0x58] sm:$0xff]
    %v147 = vld [vmem:[#allocation2 + $0x60] sm:$0xff]
    %v148 = vld [vmem:[#allocation2 + $0x68] sm:$0xff]
    %v149 = vld [vmem:[#allocation2 + $0x70] sm:$0xff]
    %v150 = vld [vmem:[#allocation2 + $0x78] sm:$0xff]
    %v151 = vld [vmem:[#allocation2 + $0x80] sm:$0xff]
    %v152 = vld [vmem:[#allocation2 + $0x88] sm:$0xff]
    %v153 = vld [vmem:[#allocation2 + $0x90] sm:$0xff]
    %v154 = vld [vmem:[#allocation2 + $0x98] sm:$0xff]
    %156 = vset.pattern.permute.xlu0 0
    %157 = vperm.xlu0 %156, %v147
    %v158 = vpop.permute.xlu0 %157
    %161 = vset.pattern.permute.xlu0 0
    %162 = vperm.xlu0 %161, %v148
    %v163 = vpop.permute.xlu0 %162
    %166 = vset.pattern.permute.xlu0 0
    %167 = vperm.xlu0 %166, %v149
    %v168 = vpop.permute.xlu0 %167
    %171 = vset.pattern.permute.xlu0 0
    %172 = vperm.xlu0 %171, %v150
    %v173 = vpop.permute.xlu0 %172
    %176 = vset.pattern.permute.xlu0 0
    %177 = vperm.xlu0 %176, %v151
    %v178 = vpop.permute.xlu0 %177
    %181 = vset.pattern.permute.xlu0 0
    %182 = vperm.xlu0 %181, %v152
    %v183 = vpop.permute.xlu0 %182
    %186 = vset.pattern.permute.xlu0 0
    %187 = vperm.xlu0 %186, %v153
    %v188 = vpop.permute.xlu0 %187
    %191 = vset.pattern.permute.xlu0 0
    %192 = vperm.xlu0 %191, %v154
    %v193 = vpop.permute.xlu0 %192
    %vm195 = vcmask 130048
    %v197 = vsel %vm195, %v139, 0
    %v200 = vsel %vm195, %v140, 0
    %v203 = vsel %vm195, %v141, 0
    %v206 = vsel %vm195, %v142, 0
    %v209 = vsel %vm195, %v143, 0
    %v212 = vsel %vm195, %v144, 0
    %v215 = vsel %vm195, %v145, 0
    %v218 = vsel %vm195, %v146, 0
    %220 = vmatprep.subr.mxu0 %v124
    %221 = vmatpush1.msra.mxu0 %v123
    %222 = vmatprep.subr.mxu0 %v132
    %223 = vmatpush1.msra.mxu0 %v131
    %224 = vmatprep.subr.mxu0 0.0
    %225 = vmatpush1.msra.mxu0 0.0
    %226 = vmatprep.subr.mxu0 0.0
    %227 = vmatpush1.msra.mxu0 0.0
    %228 = vmatprep.subr.mxu0 0.0
    %229 = vmatpush1.msra.mxu0 0.0
    %230 = vmatprep.subr.mxu0 0.0
    %231 = vmatpush1.msra.mxu0 0.0
    %232 = vmatprep.subr.mxu0 0.0
    %233 = vmatpush1.msra.mxu0 0.0
    %234 = vmatprep.subr.mxu0 0.0
    %235 = vmatpush1.msra.mxu0 0.0
    %236 = vmatprep.subr.mxu0 0.0
    %237 = vmatpush1.msra.mxu0 0.0
    %238 = vmatprep.subr.mxu0 0.0
    %239 = vmatpush1.msra.mxu0 0.0
    %240 = vmatprep.subr.mxu0 0.0
    %241 = vmatpush1.msra.mxu0 0.0
    %242 = vmatprep.subr.mxu0 0.0
    %243 = vmatpush1.msra.mxu0 0.0
    %244 = vmatprep.subr.mxu0 0.0
    %245 = vmatpush1.msra.mxu0 0.0
    %246 = vmatprep.subr.mxu0 0.0
    %247 = vmatpush1.msra.mxu0 0.0
    %248 = vmatprep.subr.mxu0 0.0
    %249 = vmatpush1.msra.mxu0 0.0
    %250 = vmatprep.subr.mxu0 0.0
    %251 = vmatpush1.msra.mxu0 0.0
    %252 = vmatprep.subr.mxu0 0.0
    %253 = vmatpush1.msra.mxu0 0.0
    %254 = vmatprep.subr.mxu0 0.0
    %255 = vmatpush1.msra.mxu0 0.0
    %256 = vmatprep.subr.mxu0 0.0
    %257 = vmatpush1.msra.mxu0 0.0
    %258 = vmatprep.subr.mxu0 0.0
    %259 = vmatpush1.msra.mxu0 0.0
    %260 = vmatprep.subr.mxu0 0.0
    %261 = vmatpush1.msra.mxu0 0.0
    %262 = vmatprep.subr.mxu0 0.0
    %263 = vmatpush1.msra.mxu0 0.0
    %264 = vmatprep.subr.mxu0 0.0
    %265 = vmatpush1.msra.mxu0 0.0
    %266 = vmatprep.subr.mxu0 0.0
    %267 = vmatpush1.msra.mxu0 0.0
    %268 = vmatprep.subr.mxu0 0.0
    %269 = vmatpush1.msra.mxu0 0.0
    %270 = vmatprep.subr.mxu0 0.0
    %271 = vmatpush1.msra.mxu0 0.0
    %272 = vmatprep.subr.mxu0 0.0
    %273 = vmatpush1.msra.mxu0 0.0
    %274 = vmatprep.subr.mxu0 0.0
    %275 = vmatpush1.msra.mxu0 0.0
    %276 = vmatprep.subr.mxu0 0.0
    %277 = vmatpush1.msra.mxu0 0.0
    %278 = vmatprep.subr.mxu0 0.0
    %279 = vmatpush1.msra.mxu0 0.0
    %280 = vmatprep.subr.mxu0 0.0
    %281 = vmatpush1.msra.mxu0 0.0
    %282 = vmatprep.subr.mxu0 0.0
    %283 = vmatpush1.msra.mxu0 0.0
    %284 = vmatprep.mubr.f32.mxu0 0.0
    %285 = vmatmul.mubr.f32.gmra.mrb[0].mxu0 %v197
    %v286 = vpop.f32.mrb[0].mxu0
    %v287 = vadd.f32 %v158, %v286
    %v288 = vpop.f32.mrb[0].mxu0
    %v289 = vadd.f32 %v158, %v288
    %290 = vmatprep.mubr.f32.mxu0 0.0
    %291 = vmatmul.mubr.f32.gmra.mrb[0].mxu0 %v200
    %v292 = vpop.f32.mrb[0].mxu0
    %v293 = vadd.f32 %v163, %v292
    %v294 = vpop.f32.mrb[0].mxu0
    %v295 = vadd.f32 %v163, %v294
    %296 = vmatprep.mubr.f32.mxu0 0.0
    %297 = vmatmul.mubr.f32.gmra.mrb[0].mxu0 %v203
    %v298 = vpop.f32.mrb[0].mxu0
    %v299 = vadd.f32 %v168, %v298
    %v300 = vpop.f32.mrb[0].mxu0
    %v301 = vadd.f32 %v168, %v300
    %302 = vmatprep.mubr.f32.mxu0 0.0
    %303 = vmatmul.mubr.f32.gmra.mrb[0].mxu0 %v206
    %v304 = vpop.f32.mrb[0].mxu0
    %v305 = vadd.f32 %v173, %v304
    %v306 = vpop.f32.mrb[0].mxu0
    %v307 = vadd.f32 %v173, %v306
    %308 = vmatprep.mubr.f32.mxu0 0.0
    %309 = vmatmul.mubr.f32.gmra.mrb[0].mxu0 %v209
    %v310 = vpop.f32.mrb[0].mxu0
    %v311 = vadd.f32 %v178, %v310
    %v312 = vpop.f32.mrb[0].mxu0
    %v313 = vadd.f32 %v178, %v312
    %314 = vmatprep.mubr.f32.mxu0 0.0
    %315 = vmatmul.mubr.f32.gmra.mrb[0].mxu0 %v212
    %v316 = vpop.f32.mrb[0].mxu0
    %v317 = vadd.f32 %v183, %v316
    %v318 = vpop.f32.mrb[0].mxu0
    %v319 = vadd.f32 %v183, %v318
    %320 = vmatprep.mubr.f32.mxu0 0.0
    %321 = vmatmul.mubr.f32.gmra.mrb[0].mxu0 %v215
    %v322 = vpop.f32.mrb[0].mxu0
    %v323 = vadd.f32 %v188, %v322
    %v324 = vpop.f32.mrb[0].mxu0
    %v325 = vadd.f32 %v188, %v324
    %326 = vmatprep.mubr.f32.mxu0 0.0
    %327 = vmatmul.mubr.f32.gmra.mrb[0].mxu0 %v218
    %v328 = vpop.f32.mrb[0].mxu0
    %v329 = vadd.f32 %v193, %v328
    %v330 = vpop.f32.mrb[0].mxu0
    %v331 = vadd.f32 %v193, %v330
    %332 = vdwg.mxu0
    %333 = vmatprep.subr.mxu0 %v126
    %334 = vmatpush1.msra.mxu0 %v125
    %335 = vmatprep.subr.mxu0 %v134
    %336 = vmatpush1.msra.mxu0 %v133
    %337 = vmatprep.subr.mxu0 0.0
    %338 = vmatpush1.msra.mxu0 0.0
    %339 = vmatprep.subr.mxu0 0.0
    %340 = vmatpush1.msra.mxu0 0.0
    %341 = vmatprep.subr.mxu0 0.0
    %342 = vmatpush1.msra.mxu0 0.0
    %343 = vmatprep.subr.mxu0 0.0
    %344 = vmatpush1.msra.mxu0 0.0
    %345 = vmatprep.subr.mxu0 0.0
    %346 = vmatpush1.msra.mxu0 0.0
    %347 = vmatprep.subr.mxu0 0.0
    %348 = vmatpush1.msra.mxu0 0.0
    %349 = vmatprep.subr.mxu0 0.0
    %350 = vmatpush1.msra.mxu0 0.0
    %351 = vmatprep.subr.mxu0 0.0
    %352 = vmatpush1.msra.mxu0 0.0
    %353 = vmatprep.subr.mxu0 0.0
    %354 = vmatpush1.msra.mxu0 0.0
    %355 = vmatprep.subr.mxu0 0.0
    %356 = vmatpush1.msra.mxu0 0.0
    %357 = vmatprep.subr.mxu0 0.0
    %358 = vmatpush1.msra.mxu0 0.0
    %359 = vmatprep.subr.mxu0 0.0
    %360 = vmatpush1.msra.mxu0 0.0
    %361 = vmatprep.subr.mxu0 0.0
    %362 = vmatpush1.msra.mxu0 0.0
    %363 = vmatprep.subr.mxu0 0.0
    %364 = vmatpush1.msra.mxu0 0.0
    %365 = vmatprep.subr.mxu0 0.0
    %366 = vmatpush1.msra.mxu0 0.0
    %367 = vmatprep.subr.mxu0 0.0
    %368 = vmatpush1.msra.mxu0 0.0
    %369 = vmatprep.subr.mxu0 0.0
    %370 = vmatpush1.msra.mxu0 0.0
    %371 = vmatprep.subr.mxu0 0.0
    %372 = vmatpush1.msra.mxu0 0.0
    %373 = vmatprep.subr.mxu0 0.0
    %374 = vmatpush1.msra.mxu0 0.0
    %375 = vmatprep.subr.mxu0 0.0
    %376 = vmatpush1.msra.mxu0 0.0
    %377 = vmatprep.subr.mxu0 0.0
    %378 = vmatpush1.msra.mxu0 0.0
    %379 = vmatprep.subr.mxu0 0.0
    %380 = vmatpush1.msra.mxu0 0.0
    %381 = vmatprep.subr.mxu0 0.0
    %382 = vmatpush1.msra.mxu0 0.0
    %383 = vmatprep.subr.mxu0 0.0
    %384 = vmatpush1.msra.mxu0 0.0
    %385 = vmatprep.subr.mxu0 0.0
    %386 = vmatpush1.msra.mxu0 0.0
    %387 = vmatprep.subr.mxu0 0.0
    %388 = vmatpush1.msra.mxu0 0.0
    %389 = vmatprep.subr.mxu0 0.0
    %390 = vmatpush1.msra.mxu0 0.0
    %391 = vmatprep.subr.mxu0 0.0
    %392 = vmatpush1.msra.mxu0 0.0
    %393 = vmatprep.subr.mxu0 0.0
    %394 = vmatpush1.msra.mxu0 0.0
    %395 = vmatprep.subr.mxu0 0.0
    %396 = vmatpush1.msra.mxu0 0.0
    %397 = vmatprep.mubr.f32.mxu0 0.0
    %398 = vmatmul.mubr.f32.gmra.mrb[0].mxu0 %v197
    %v399 = vpop.f32.mrb[0].mxu0
    %v400 = vadd.f32 %v158, %v399
    %v401 = vpop.f32.mrb[0].mxu0
    %v402 = vadd.f32 %v158, %v401
    %403 = vmatprep.mubr.f32.mxu0 0.0
    %404 = vmatmul.mubr.f32.gmra.mrb[0].mxu0 %v200
    %v405 = vpop.f32.mrb[0].mxu0
    %v406 = vadd.f32 %v163, %v405
    %v407 = vpop.f32.mrb[0].mxu0
    %v408 = vadd.f32 %v163, %v407
    %409 = vmatprep.mubr.f32.mxu0 0.0
    %410 = vmatmul.mubr.f32.gmra.mrb[0].mxu0 %v203
    %v411 = vpop.f32.mrb[0].mxu0
    %v412 = vadd.f32 %v168, %v411
    %v413 = vpop.f32.mrb[0].mxu0
    %v414 = vadd.f32 %v168, %v413
    %415 = vmatprep.mubr.f32.mxu0 0.0
    %416 = vmatmul.mubr.f32.gmra.mrb[0].mxu0 %v206
    %v417 = vpop.f32.mrb[0].mxu0
    %v418 = vadd.f32 %v173, %v417
    %v419 = vpop.f32.mrb[0].mxu0
    %v420 = vadd.f32 %v173, %v419
    %421 = vmatprep.mubr.f32.mxu0 0.0
    %422 = vmatmul.mubr.f32.gmra.mrb[0].mxu0 %v209
    %v423 = vpop.f32.mrb[0].mxu0
    %v424 = vadd.f32 %v178, %v423
    %v425 = vpop.f32.mrb[0].mxu0
    %v426 = vadd.f32 %v178, %v425
    %427 = vmatprep.mubr.f32.mxu0 0.0
    %428 = vmatmul.mubr.f32.gmra.mrb[0].mxu0 %v212
    %v429 = vpop.f32.mrb[0].mxu0
    %v430 = vadd.f32 %v183, %v429
    %v431 = vpop.f32.mrb[0].mxu0
    %v432 = vadd.f32 %v183, %v431
    %433 = vmatprep.mubr.f32.mxu0 0.0
    %434 = vmatmul.mubr.f32.gmra.mrb[0].mxu0 %v215
    %v435 = vpop.f32.mrb[0].mxu0
    %v436 = vadd.f32 %v188, %v435
    %v437 = vpop.f32.mrb[0].mxu0
    %v438 = vadd.f32 %v188, %v437
    %439 = vmatprep.mubr.f32.mxu0 0.0
    %440 = vmatmul.mubr.f32.gmra.mrb[0].mxu0 %v218
    %v441 = vpop.f32.mrb[0].mxu0
    %v442 = vadd.f32 %v193, %v441
    %v443 = vpop.f32.mrb[0].mxu0
    %v444 = vadd.f32 %v193, %v443
    %445 = vdwg.mxu0
    %446 = vmatprep.subr.mxu0 %v128
    %447 = vmatpush1.msra.mxu0 %v127
    %448 = vmatprep.subr.mxu0 %v136
    %449 = vmatpush1.msra.mxu0 %v135
    %450 = vmatprep.subr.mxu0 0.0
    %451 = vmatpush1.msra.mxu0 0.0
    %452 = vmatprep.subr.mxu0 0.0
    %453 = vmatpush1.msra.mxu0 0.0
    %454 = vmatprep.subr.mxu0 0.0
    %455 = vmatpush1.msra.mxu0 0.0
    %456 = vmatprep.subr.mxu0 0.0
    %457 = vmatpush1.msra.mxu0 0.0
    %458 = vmatprep.subr.mxu0 0.0
    %459 = vmatpush1.msra.mxu0 0.0
    %460 = vmatprep.subr.mxu0 0.0
    %461 = vmatpush1.msra.mxu0 0.0
    %462 = vmatprep.subr.mxu0 0.0
    %463 = vmatpush1.msra.mxu0 0.0
    %464 = vmatprep.subr.mxu0 0.0
    %465 = vmatpush1.msra.mxu0 0.0
    %466 = vmatprep.subr.mxu0 0.0
    %467 = vmatpush1.msra.mxu0 0.0
    %468 = vmatprep.subr.mxu0 0.0
    %469 = vmatpush1.msra.mxu0 0.0
    %470 = vmatprep.subr.mxu0 0.0
    %471 = vmatpush1.msra.mxu0 0.0
    %472 = vmatprep.subr.mxu0 0.0
    %473 = vmatpush1.msra.mxu0 0.0
    %474 = vmatprep.subr.mxu0 0.0
    %475 = vmatpush1.msra.mxu0 0.0
    %476 = vmatprep.subr.mxu0 0.0
    %477 = vmatpush1.msra.mxu0 0.0
    %478 = vmatprep.subr.mxu0 0.0
    %479 = vmatpush1.msra.mxu0 0.0
    %480 = vmatprep.subr.mxu0 0.0
    %481 = vmatpush1.msra.mxu0 0.0
    %482 = vmatprep.subr.mxu0 0.0
    %483 = vmatpush1.msra.mxu0 0.0
    %484 = vmatprep.subr.mxu0 0.0
    %485 = vmatpush1.msra.mxu0 0.0
    %486 = vmatprep.subr.mxu0 0.0
    %487 = vmatpush1.msra.mxu0 0.0
    %488 = vmatprep.subr.mxu0 0.0
    %489 = vmatpush1.msra.mxu0 0.0
    %490 = vmatprep.subr.mxu0 0.0
    %491 = vmatpush1.msra.mxu0 0.0
    %492 = vmatprep.subr.mxu0 0.0
    %493 = vmatpush1.msra.mxu0 0.0
    %494 = vmatprep.subr.mxu0 0.0
    %495 = vmatpush1.msra.mxu0 0.0
    %496 = vmatprep.subr.mxu0 0.0
    %497 = vmatpush1.msra.mxu0 0.0
    %498 = vmatprep.subr.mxu0 0.0
    %499 = vmatpush1.msra.mxu0 0.0
    %500 = vmatprep.subr.mxu0 0.0
    %501 = vmatpush1.msra.mxu0 0.0
    %502 = vmatprep.subr.mxu0 0.0
    %503 = vmatpush1.msra.mxu0 0.0
    %504 = vmatprep.subr.mxu0 0.0
    %505 = vmatpush1.msra.mxu0 0.0
    %506 = vmatprep.subr.mxu0 0.0
    %507 = vmatpush1.msra.mxu0 0.0
    %508 = vmatprep.subr.mxu0 0.0
    %509 = vmatpush1.msra.mxu0 0.0
    %510 = vmatprep.mubr.f32.mxu0 0.0
    %511 = vmatmul.mubr.f32.gmra.mrb[0].mxu0 %v197
    %v512 = vpop.f32.mrb[0].mxu0
    %v513 = vadd.f32 %v158, %v512
    %v514 = vpop.f32.mrb[0].mxu0
    %v515 = vadd.f32 %v158, %v514
    %516 = vmatprep.mubr.f32.mxu0 0.0
    %517 = vmatmul.mubr.f32.gmra.mrb[0].mxu0 %v200
    %v518 = vpop.f32.mrb[0].mxu0
    %v519 = vadd.f32 %v163, %v518
    %v520 = vpop.f32.mrb[0].mxu0
    %v521 = vadd.f32 %v163, %v520
    %522 = vmatprep.mubr.f32.mxu0 0.0
    %523 = vmatmul.mubr.f32.gmra.mrb[0].mxu0 %v203
    %v524 = vpop.f32.mrb[0].mxu0
    %v525 = vadd.f32 %v168, %v524
    %v526 = vpop.f32.mrb[0].mxu0
    %v527 = vadd.f32 %v168, %v526
    %528 = vmatprep.mubr.f32.mxu0 0.0
    %529 = vmatmul.mubr.f32.gmra.mrb[0].mxu0 %v206
    %v530 = vpop.f32.mrb[0].mxu0
    %v531 = vadd.f32 %v173, %v530
    %v532 = vpop.f32.mrb[0].mxu0
    %v533 = vadd.f32 %v173, %v532
    %534 = vmatprep.mubr.f32.mxu0 0.0
    %535 = vmatmul.mubr.f32.gmra.mrb[0].mxu0 %v209
    %v536 = vpop.f32.mrb[0].mxu0
    %v537 = vadd.f32 %v178, %v536
    %v538 = vpop.f32.mrb[0].mxu0
    %v539 = vadd.f32 %v178, %v538
    %540 = vmatprep.mubr.f32.mxu0 0.0
    %541 = vmatmul.mubr.f32.gmra.mrb[0].mxu0 %v212
    %v542 = vpop.f32.mrb[0].mxu0
    %v543 = vadd.f32 %v183, %v542
    %v544 = vpop.f32.mrb[0].mxu0
    %v545 = vadd.f32 %v183, %v544
    %546 = vmatprep.mubr.f32.mxu0 0.0
    %547 = vmatmul.mubr.f32.gmra.mrb[0].mxu0 %v215
    %v548 = vpop.f32.mrb[0].mxu0
    %v549 = vadd.f32 %v188, %v548
    %v550 = vpop.f32.mrb[0].mxu0
    %v551 = vadd.f32 %v188, %v550
    %552 = vmatprep.mubr.f32.mxu0 0.0
    %553 = vmatmul.mubr.f32.gmra.mrb[0].mxu0 %v218
    %v554 = vpop.f32.mrb[0].mxu0
    %v555 = vadd.f32 %v193, %v554
    %v556 = vpop.f32.mrb[0].mxu0
    %v557 = vadd.f32 %v193, %v556
    %558 = vdwg.mxu0
    %559 = vmatprep.subr.mxu0 %v130
    %560 = vmatpush1.msra.mxu0 %v129
    %561 = vmatprep.subr.mxu0 %v138
    %562 = vmatpush1.msra.mxu0 %v137
    %563 = vmatprep.subr.mxu0 0.0
    %564 = vmatpush1.msra.mxu0 0.0
    %565 = vmatprep.subr.mxu0 0.0
    %566 = vmatpush1.msra.mxu0 0.0
    %567 = vmatprep.subr.mxu0 0.0
    %568 = vmatpush1.msra.mxu0 0.0
    %569 = vmatprep.subr.mxu0 0.0
    %570 = vmatpush1.msra.mxu0 0.0
    %571 = vmatprep.subr.mxu0 0.0
    %572 = vmatpush1.msra.mxu0 0.0
    %573 = vmatprep.subr.mxu0 0.0
    %574 = vmatpush1.msra.mxu0 0.0
    %575 = vmatprep.subr.mxu0 0.0
    %576 = vmatpush1.msra.mxu0 0.0
    %577 = vmatprep.subr.mxu0 0.0
    %578 = vmatpush1.msra.mxu0 0.0
    %579 = vmatprep.subr.mxu0 0.0
    %580 = vmatpush1.msra.mxu0 0.0
    %581 = vmatprep.subr.mxu0 0.0
    %582 = vmatpush1.msra.mxu0 0.0
    %583 = vmatprep.subr.mxu0 0.0
    %584 = vmatpush1.msra.mxu0 0.0
    %585 = vmatprep.subr.mxu0 0.0
    %586 = vmatpush1.msra.mxu0 0.0
    %587 = vmatprep.subr.mxu0 0.0
    %588 = vmatpush1.msra.mxu0 0.0
    %589 = vmatprep.subr.mxu0 0.0
    %590 = vmatpush1.msra.mxu0 0.0
    %591 = vmatprep.subr.mxu0 0.0
    %592 = vmatpush1.msra.mxu0 0.0
    %593 = vmatprep.subr.mxu0 0.0
    %594 = vmatpush1.msra.mxu0 0.0
    %595 = vmatprep.subr.mxu0 0.0
    %596 = vmatpush1.msra.mxu0 0.0
    %597 = vmatprep.subr.mxu0 0.0
    %598 = vmatpush1.msra.mxu0 0.0
    %599 = vmatprep.subr.mxu0 0.0
    %600 = vmatpush1.msra.mxu0 0.0
    %601 = vmatprep.subr.mxu0 0.0
    %602 = vmatpush1.msra.mxu0 0.0
    %603 = vmatprep.subr.mxu0 0.0
    %604 = vmatpush1.msra.mxu0 0.0
    %605 = vmatprep.subr.mxu0 0.0
    %606 = vmatpush1.msra.mxu0 0.0
    %607 = vmatprep.subr.mxu0 0.0
    %608 = vmatpush1.msra.mxu0 0.0
    %609 = vmatprep.subr.mxu0 0.0
    %610 = vmatpush1.msra.mxu0 0.0
    %611 = vmatprep.subr.mxu0 0.0
    %612 = vmatpush1.msra.mxu0 0.0
    %613 = vmatprep.subr.mxu0 0.0
    %614 = vmatpush1.msra.mxu0 0.0
    %615 = vmatprep.subr.mxu0 0.0
    %616 = vmatpush1.msra.mxu0 0.0
    %617 = vmatprep.subr.mxu0 0.0
    %618 = vmatpush1.msra.mxu0 0.0
    %619 = vmatprep.subr.mxu0 0.0
    %620 = vmatpush1.msra.mxu0 0.0
    %621 = vmatprep.subr.mxu0 0.0
    %622 = vmatpush1.msra.mxu0 0.0
    %623 = vmatprep.mubr.f32.mxu0 0.0
    %624 = vmatmul.mubr.f32.gmra.mrb[0].mxu0 %v197
    %v625 = vpop.f32.mrb[0].mxu0
    %v626 = vadd.f32 %v158, %v625
    %v627 = vpop.f32.mrb[0].mxu0
    %v628 = vadd.f32 %v158, %v627
    %629 = vmatprep.mubr.f32.mxu0 0.0
    %630 = vmatmul.mubr.f32.gmra.mrb[0].mxu0 %v200
    %v631 = vpop.f32.mrb[0].mxu0
    %v632 = vadd.f32 %v163, %v631
    %v633 = vpop.f32.mrb[0].mxu0
    %v634 = vadd.f32 %v163, %v633
    %635 = vmatprep.mubr.f32.mxu0 0.0
    %636 = vmatmul.mubr.f32.gmra.mrb[0].mxu0 %v203
    %v637 = vpop.f32.mrb[0].mxu0
    %v638 = vadd.f32 %v168, %v637
    %v639 = vpop.f32.mrb[0].mxu0
    %v640 = vadd.f32 %v168, %v639
    %641 = vmatprep.mubr.f32.mxu0 0.0
    %642 = vmatmul.mubr.f32.gmra.mrb[0].mxu0 %v206
    %v643 = vpop.f32.mrb[0].mxu0
    %v644 = vadd.f32 %v173, %v643
    %v645 = vpop.f32.mrb[0].mxu0
    %v646 = vadd.f32 %v173, %v645
    %647 = vmatprep.mubr.f32.mxu0 0.0
    %648 = vmatmul.mubr.f32.gmra.mrb[0].mxu0 %v209
    %v649 = vpop.f32.mrb[0].mxu0
    %v650 = vadd.f32 %v178, %v649
    %v651 = vpop.f32.mrb[0].mxu0
    %v652 = vadd.f32 %v178, %v651
    %653 = vmatprep.mubr.f32.mxu0 0.0
    %654 = vmatmul.mubr.f32.gmra.mrb[0].mxu0 %v212
    %v655 = vpop.f32.mrb[0].mxu0
    %v656 = vadd.f32 %v183, %v655
    %v657 = vpop.f32.mrb[0].mxu0
    %v658 = vadd.f32 %v183, %v657
    %659 = vmatprep.mubr.f32.mxu0 0.0
    %660 = vmatmul.mubr.f32.gmra.mrb[0].mxu0 %v215
    %v661 = vpop.f32.mrb[0].mxu0
    %v662 = vadd.f32 %v188, %v661
    %v663 = vpop.f32.mrb[0].mxu0
    %v664 = vadd.f32 %v188, %v663
    %665 = vmatprep.mubr.f32.mxu0 0.0
    %666 = vmatmul.mubr.f32.gmra.mrb[0].mxu0 %v218
    %v667 = vpop.f32.mrb[0].mxu0
    %v668 = vadd.f32 %v193, %v667
    %v669 = vpop.f32.mrb[0].mxu0
    %v670 = vadd.f32 %v193, %v669
    %671 = vdwg.mxu0
    %v672 = vmax.f32 %v287, 0.0
    %v673 = vmax.f32 %v289, 0.0
    %v674 = vmax.f32 %v400, 0.0
    %v675 = vmax.f32 %v402, 0.0
    %v676 = vmax.f32 %v513, 0.0
    %v677 = vmax.f32 %v515, 0.0
    %v678 = vmax.f32 %v626, 0.0
    %v679 = vmax.f32 %v628, 0.0
    %v680 = vmax.f32 %v293, 0.0
    %v681 = vmax.f32 %v295, 0.0
    %v682 = vmax.f32 %v406, 0.0
    %v683 = vmax.f32 %v408, 0.0
    %v684 = vmax.f32 %v519, 0.0
    %v685 = vmax.f32 %v521, 0.0
    %v686 = vmax.f32 %v632, 0.0
    %v687 = vmax.f32 %v634, 0.0
    %v688 = vmax.f32 %v299, 0.0
    %v689 = vmax.f32 %v301, 0.0
    %v690 = vmax.f32 %v412, 0.0
    %v691 = vmax.f32 %v414, 0.0
    %v692 = vmax.f32 %v525, 0.0
    %v693 = vmax.f32 %v527, 0.0
    %v694 = vmax.f32 %v638, 0.0
    %v695 = vmax.f32 %v640, 0.0
    %v696 = vmax.f32 %v305, 0.0
    %v697 = vmax.f32 %v307, 0.0
    %v698 = vmax.f32 %v418, 0.0
    %v699 = vmax.f32 %v420, 0.0
    %v700 = vmax.f32 %v531, 0.0
    %v701 = vmax.f32 %v533, 0.0
    %v702 = vmax.f32 %v644, 0.0
    %v703 = vmax.f32 %v646, 0.0
    %v704 = vmax.f32 %v311, 0.0
    %v705 = vmax.f32 %v313, 0.0
    %v706 = vmax.f32 %v424, 0.0
    %v707 = vmax.f32 %v426, 0.0
    %v708 = vmax.f32 %v537, 0.0
    %v709 = vmax.f32 %v539, 0.0
    %v710 = vmax.f32 %v650, 0.0
    %v711 = vmax.f32 %v652, 0.0
    %v712 = vmax.f32 %v317, 0.0
    %v713 = vmax.f32 %v319, 0.0
    %v714 = vmax.f32 %v430, 0.0
    %v715 = vmax.f32 %v432, 0.0
    %v716 = vmax.f32 %v543, 0.0
    %v717 = vmax.f32 %v545, 0.0
    %v718 = vmax.f32 %v656, 0.0
    %v719 = vmax.f32 %v658, 0.0
    %v720 = vmax.f32 %v323, 0.0
    %v721 = vmax.f32 %v325, 0.0
    %v722 = vmax.f32 %v436, 0.0
    %v723 = vmax.f32 %v438, 0.0
    %v724 = vmax.f32 %v549, 0.0
    %v725 = vmax.f32 %v551, 0.0
    %v726 = vmax.f32 %v662, 0.0
    %v727 = vmax.f32 %v664, 0.0
    %v728 = vmax.f32 %v329, 0.0
    %v729 = vmax.f32 %v331, 0.0
    %v730 = vmax.f32 %v442, 0.0
    %v731 = vmax.f32 %v444, 0.0
    %v732 = vmax.f32 %v555, 0.0
    %v733 = vmax.f32 %v557, 0.0
    %v734 = vmax.f32 %v668, 0.0
    %v735 = vmax.f32 %v670, 0.0
    %v736 = vld [vmem:[#allocation2 + $0xa0] sm:$0xff]
    %v737 = vld [vmem:[#allocation2 + $0xa8] sm:$0xff]
    %v738 = vld [vmem:[#allocation2 + $0xb0] sm:$0xff]
    %v739 = vld [vmem:[#allocation2 + $0xb8] sm:$0xff]
    %v740 = vld [vmem:[#allocation2 + $0xc0] sm:$0xff]
    %v741 = vld [vmem:[#allocation2 + $0xc8] sm:$0xff]
    %v742 = vld [vmem:[#allocation2 + $0xd0] sm:$0xff]
    %v743 = vld [vmem:[#allocation2 + $0xd8] sm:$0xff]
    %v744 = vld [vmem:[#allocation2 + $0xe0] sm:$0xff]
    %v745 = vld [vmem:[#allocation2 + $0xe8] sm:$0xff]
    %v746 = vld [vmem:[#allocation2 + $0xf0] sm:$0xff]
    %v747 = vld [vmem:[#allocation2 + $0xf8] sm:$0xff]
    %v748 = vld [vmem:[#allocation2 + $0x100] sm:$0xff]
    %v749 = vld [vmem:[#allocation2 + $0x108] sm:$0xff]
    %v750 = vld [vmem:[#allocation2 + $0x110] sm:$0xff]
    %v751 = vld [vmem:[#allocation2 + $0x118] sm:$0xff]
    %753 = vset.pattern.permute.xlu0 0
    %754 = vperm.xlu0 %753, %v744
    %v755 = vpop.permute.xlu0 %754
    %758 = vset.pattern.permute.xlu0 0
    %759 = vperm.xlu0 %758, %v745
    %v760 = vpop.permute.xlu0 %759
    %763 = vset.pattern.permute.xlu0 0
    %764 = vperm.xlu0 %763, %v746
    %v765 = vpop.permute.xlu0 %764
    %768 = vset.pattern.permute.xlu0 0
    %769 = vperm.xlu0 %768, %v747
    %v770 = vpop.permute.xlu0 %769
    %773 = vset.pattern.permute.xlu0 0
    %774 = vperm.xlu0 %773, %v748
    %v775 = vpop.permute.xlu0 %774
    %778 = vset.pattern.permute.xlu0 0
    %779 = vperm.xlu0 %778, %v749
    %v780 = vpop.permute.xlu0 %779
    %783 = vset.pattern.permute.xlu0 0
    %784 = vperm.xlu0 %783, %v750
    %v785 = vpop.permute.xlu0 %784
    %788 = vset.pattern.permute.xlu0 0
    %789 = vperm.xlu0 %788, %v751
    %v790 = vpop.permute.xlu0 %789
    %vm792 = vcmask 523264
    %v794 = vsel %vm792, %v736, 0
    %v797 = vsel %vm792, %v737, 0
    %v800 = vsel %vm792, %v738, 0
    %v803 = vsel %vm792, %v739, 0
    %v806 = vsel %vm792, %v740, 0
    %v809 = vsel %vm792, %v741, 0
    %v812 = vsel %vm792, %v742, 0
    %v815 = vsel %vm792, %v743, 0
    %817 = vmatprep.subr.mxu0 %v673
    %818 = vmatpush1.msra.mxu0 %v672
    %819 = vmatprep.subr.mxu0 %v681
    %820 = vmatpush1.msra.mxu0 %v680
    %821 = vmatprep.subr.mxu0 %v689
    %822 = vmatpush1.msra.mxu0 %v688
    %823 = vmatprep.subr.mxu0 %v697
    %824 = vmatpush1.msra.mxu0 %v696
    %825 = vmatprep.subr.mxu0 %v705
    %826 = vmatpush1.msra.mxu0 %v704
    %827 = vmatprep.subr.mxu0 %v713
    %828 = vmatpush1.msra.mxu0 %v712
    %829 = vmatprep.subr.mxu0 %v721
    %830 = vmatpush1.msra.mxu0 %v720
    %831 = vmatprep.subr.mxu0 %v729
    %832 = vmatpush1.msra.mxu0 %v728
    %833 = vmatprep.subr.mxu0 0.0
    %834 = vmatpush1.msra.mxu0 0.0
    %835 = vmatprep.subr.mxu0 0.0
    %836 = vmatpush1.msra.mxu0 0.0
    %837 = vmatprep.subr.mxu0 0.0
    %838 = vmatpush1.msra.mxu0 0.0
    %839 = vmatprep.subr.mxu0 0.0
    %840 = vmatpush1.msra.mxu0 0.0
    %841 = vmatprep.subr.mxu0 0.0
    %842 = vmatpush1.msra.mxu0 0.0
    %843 = vmatprep.subr.mxu0 0.0
    %844 = vmatpush1.msra.mxu0 0.0
    %845 = vmatprep.subr.mxu0 0.0
    %846 = vmatpush1.msra.mxu0 0.0
    %847 = vmatprep.subr.mxu0 0.0
    %848 = vmatpush1.msra.mxu0 0.0
    %849 = vmatprep.subr.mxu0 0.0
    %850 = vmatpush1.msra.mxu0 0.0
    %851 = vmatprep.subr.mxu0 0.0
    %852 = vmatpush1.msra.mxu0 0.0
    %853 = vmatprep.subr.mxu0 0.0
    %854 = vmatpush1.msra.mxu0 0.0
    %855 = vmatprep.subr.mxu0 0.0
    %856 = vmatpush1.msra.mxu0 0.0
    %857 = vmatprep.subr.mxu0 0.0
    %858 = vmatpush1.msra.mxu0 0.0
    %859 = vmatprep.subr.mxu0 0.0
    %860 = vmatpush1.msra.mxu0 0.0
    %861 = vmatprep.subr.mxu0 0.0
    %862 = vmatpush1.msra.mxu0 0.0
    %863 = vmatprep.subr.mxu0 0.0
    %864 = vmatpush1.msra.mxu0 0.0
    %865 = vmatprep.subr.mxu0 0.0
    %866 = vmatpush1.msra.mxu0 0.0
    %867 = vmatprep.subr.mxu0 0.0
    %868 = vmatpush1.msra.mxu0 0.0
    %869 = vmatprep.subr.mxu0 0.0
    %870 = vmatpush1.msra.mxu0 0.0
    %871 = vmatprep.subr.mxu0 0.0
    %872 = vmatpush1.msra.mxu0 0.0
    %873 = vmatprep.subr.mxu0 0.0
    %874 = vmatpush1.msra.mxu0 0.0
    %875 = vmatprep.subr.mxu0 0.0
    %876 = vmatpush1.msra.mxu0 0.0
    %877 = vmatprep.subr.mxu0 0.0
    %878 = vmatpush1.msra.mxu0 0.0
    %879 = vmatprep.subr.mxu0 0.0
    %880 = vmatpush1.msra.mxu0 0.0
    %881 = vmatprep.mubr.f32.mxu0 0.0
    %882 = vmatmul.mubr.f32.gmra.mrb[0].mxu0 %v794
    %v883 = vpop.f32.mrb[0].mxu0
    %v884 = vadd.f32 %v755, %v883
    %v885 = vpop.f32.mrb[0].mxu0
    %v886 = vadd.f32 %v755, %v885
    %887 = vmatprep.mubr.f32.mxu0 0.0
    %888 = vmatmul.mubr.f32.gmra.mrb[0].mxu0 %v797
    %v889 = vpop.f32.mrb[0].mxu0
    %v890 = vadd.f32 %v760, %v889
    %v891 = vpop.f32.mrb[0].mxu0
    %v892 = vadd.f32 %v760, %v891
    %893 = vmatprep.mubr.f32.mxu0 0.0
    %894 = vmatmul.mubr.f32.gmra.mrb[0].mxu0 %v800
    %v895 = vpop.f32.mrb[0].mxu0
    %v896 = vadd.f32 %v765, %v895
    %v897 = vpop.f32.mrb[0].mxu0
    %v898 = vadd.f32 %v765, %v897
    %899 = vmatprep.mubr.f32.mxu0 0.0
    %900 = vmatmul.mubr.f32.gmra.mrb[0].mxu0 %v803
    %v901 = vpop.f32.mrb[0].mxu0
    %v902 = vadd.f32 %v770, %v901
    %v903 = vpop.f32.mrb[0].mxu0
    %v904 = vadd.f32 %v770, %v903
    %905 = vmatprep.mubr.f32.mxu0 0.0
    %906 = vmatmul.mubr.f32.gmra.mrb[0].mxu0 %v806
    %v907 = vpop.f32.mrb[0].mxu0
    %v908 = vadd.f32 %v775, %v907
    %v909 = vpop.f32.mrb[0].mxu0
    %v910 = vadd.f32 %v775, %v909
    %911 = vmatprep.mubr.f32.mxu0 0.0
    %912 = vmatmul.mubr.f32.gmra.mrb[0].mxu0 %v809
    %v913 = vpop.f32.mrb[0].mxu0
    %v914 = vadd.f32 %v780, %v913
    %v915 = vpop.f32.mrb[0].mxu0
    %v916 = vadd.f32 %v780, %v915
    %917 = vmatprep.mubr.f32.mxu0 0.0
    %918 = vmatmul.mubr.f32.gmra.mrb[0].mxu0 %v812
    %v919 = vpop.f32.mrb[0].mxu0
    %v920 = vadd.f32 %v785, %v919
    %v921 = vpop.f32.mrb[0].mxu0
    %v922 = vadd.f32 %v785, %v921
    %923 = vmatprep.mubr.f32.mxu0 0.0
    %924 = vmatmul.mubr.f32.gmra.mrb[0].mxu0 %v815
    %v925 = vpop.f32.mrb[0].mxu0
    %v926 = vadd.f32 %v790, %v925
    %v927 = vpop.f32.mrb[0].mxu0
    %v928 = vadd.f32 %v790, %v927
    %929 = vdwg.mxu0
    %930 = vmatprep.subr.mxu0 %v675
    %931 = vmatpush1.msra.mxu0 %v674
    %932 = vmatprep.subr.mxu0 %v683
    %933 = vmatpush1.msra.mxu0 %v682
    %934 = vmatprep.subr.mxu0 %v691
    %935 = vmatpush1.msra.mxu0 %v690
    %936 = vmatprep.subr.mxu0 %v699
    %937 = vmatpush1.msra.mxu0 %v698
    %938 = vmatprep.subr.mxu0 %v707
    %939 = vmatpush1.msra.mxu0 %v706
    %940 = vmatprep.subr.mxu0 %v715
    %941 = vmatpush1.msra.mxu0 %v714
    %942 = vmatprep.subr.mxu0 %v723
    %943 = vmatpush1.msra.mxu0 %v722
    %944 = vmatprep.subr.mxu0 %v731
    %945 = vmatpush1.msra.mxu0 %v730
    %946 = vmatprep.subr.mxu0 0.0
    %947 = vmatpush1.msra.mxu0 0.0
    %948 = vmatprep.subr.mxu0 0.0
    %949 = vmatpush1.msra.mxu0 0.0
    %950 = vmatprep.subr.mxu0 0.0
    %951 = vmatpush1.msra.mxu0 0.0
    %952 = vmatprep.subr.mxu0 0.0
    %953 = vmatpush1.msra.mxu0 0.0
    %954 = vmatprep.subr.mxu0 0.0
    %955 = vmatpush1.msra.mxu0 0.0
    %956 = vmatprep.subr.mxu0 0.0
    %957 = vmatpush1.msra.mxu0 0.0
    %958 = vmatprep.subr.mxu0 0.0
    %959 = vmatpush1.msra.mxu0 0.0
    %960 = vmatprep.subr.mxu0 0.0
    %961 = vmatpush1.msra.mxu0 0.0
    %962 = vmatprep.subr.mxu0 0.0
    %963 = vmatpush1.msra.mxu0 0.0
    %964 = vmatprep.subr.mxu0 0.0
    %965 = vmatpush1.msra.mxu0 0.0
    %966 = vmatprep.subr.mxu0 0.0
    %967 = vmatpush1.msra.mxu0 0.0
    %968 = vmatprep.subr.mxu0 0.0
    %969 = vmatpush1.msra.mxu0 0.0
    %970 = vmatprep.subr.mxu0 0.0
    %971 = vmatpush1.msra.mxu0 0.0
    %972 = vmatprep.subr.mxu0 0.0
    %973 = vmatpush1.msra.mxu0 0.0
    %974 = vmatprep.subr.mxu0 0.0
    %975 = vmatpush1.msra.mxu0 0.0
    %976 = vmatprep.subr.mxu0 0.0
    %977 = vmatpush1.msra.mxu0 0.0
    %978 = vmatprep.subr.mxu0 0.0
    %979 = vmatpush1.msra.mxu0 0.0
    %980 = vmatprep.subr.mxu0 0.0
    %981 = vmatpush1.msra.mxu0 0.0
    %982 = vmatprep.subr.mxu0 0.0
    %983 = vmatpush1.msra.mxu0 0.0
    %984 = vmatprep.subr.mxu0 0.0
    %985 = vmatpush1.msra.mxu0 0.0
    %986 = vmatprep.subr.mxu0 0.0
    %987 = vmatpush1.msra.mxu0 0.0
    %988 = vmatprep.subr.mxu0 0.0
    %989 = vmatpush1.msra.mxu0 0.0
    %990 = vmatprep.subr.mxu0 0.0
    %991 = vmatpush1.msra.mxu0 0.0
    %992 = vmatprep.subr.mxu0 0.0
    %993 = vmatpush1.msra.mxu0 0.0
    %994 = vmatprep.mubr.f32.mxu0 0.0
    %995 = vmatmul.mubr.f32.gmra.mrb[0].mxu0 %v794
    %v996 = vpop.f32.mrb[0].mxu0
    %v997 = vadd.f32 %v755, %v996
    %v998 = vpop.f32.mrb[0].mxu0
    %v999 = vadd.f32 %v755, %v998
    %1000 = vmatprep.mubr.f32.mxu0 0.0
    %1001 = vmatmul.mubr.f32.gmra.mrb[0].mxu0 %v797
    %v1002 = vpop.f32.mrb[0].mxu0
    %v1003 = vadd.f32 %v760, %v1002
    %v1004 = vpop.f32.mrb[0].mxu0
    %v1005 = vadd.f32 %v760, %v1004
    %1006 = vmatprep.mubr.f32.mxu0 0.0
    %1007 = vmatmul.mubr.f32.gmra.mrb[0].mxu0 %v800
    %v1008 = vpop.f32.mrb[0].mxu0
    %v1009 = vadd.f32 %v765, %v1008
    %v1010 = vpop.f32.mrb[0].mxu0
    %v1011 = vadd.f32 %v765, %v1010
    %1012 = vmatprep.mubr.f32.mxu0 0.0
    %1013 = vmatmul.mubr.f32.gmra.mrb[0].mxu0 %v803
    %v1014 = vpop.f32.mrb[0].mxu0
    %v1015 = vadd.f32 %v770, %v1014
    %v1016 = vpop.f32.mrb[0].mxu0
    %v1017 = vadd.f32 %v770, %v1016
    %1018 = vmatprep.mubr.f32.mxu0 0.0
    %1019 = vmatmul.mubr.f32.gmra.mrb[0].mxu0 %v806
    %v1020 = vpop.f32.mrb[0].mxu0
    %v1021 = vadd.f32 %v775, %v1020
    %v1022 = vpop.f32.mrb[0].mxu0
    %v1023 = vadd.f32 %v775, %v1022
    %1024 = vmatprep.mubr.f32.mxu0 0.0
    %1025 = vmatmul.mubr.f32.gmra.mrb[0].mxu0 %v809
    %v1026 = vpop.f32.mrb[0].mxu0
    %v1027 = vadd.f32 %v780, %v1026
    %v1028 = vpop.f32.mrb[0].mxu0
    %v1029 = vadd.f32 %v780, %v1028
    %1030 = vmatprep.mubr.f32.mxu0 0.0
    %1031 = vmatmul.mubr.f32.gmra.mrb[0].mxu0 %v812
    %v1032 = vpop.f32.mrb[0].mxu0
    %v1033 = vadd.f32 %v785, %v1032
    %v1034 = vpop.f32.mrb[0].mxu0
    %v1035 = vadd.f32 %v785, %v1034
    %1036 = vmatprep.mubr.f32.mxu0 0.0
    %1037 = vmatmul.mubr.f32.gmra.mrb[0].mxu0 %v815
    %v1038 = vpop.f32.mrb[0].mxu0
    %v1039 = vadd.f32 %v790, %v1038
    %v1040 = vpop.f32.mrb[0].mxu0
    %v1041 = vadd.f32 %v790, %v1040
    %1042 = vdwg.mxu0
    %1043 = vmatprep.subr.mxu0 %v677
    %1044 = vmatpush1.msra.mxu0 %v676
    %1045 = vmatprep.subr.mxu0 %v685
    %1046 = vmatpush1.msra.mxu0 %v684
    %1047 = vmatprep.subr.mxu0 %v693
    %1048 = vmatpush1.msra.mxu0 %v692
    %1049 = vmatprep.subr.mxu0 %v701
    %1050 = vmatpush1.msra.mxu0 %v700
    %1051 = vmatprep.subr.mxu0 %v709
    %1052 = vmatpush1.msra.mxu0 %v708
    %1053 = vmatprep.subr.mxu0 %v717
    %1054 = vmatpush1.msra.mxu0 %v716
    %1055 = vmatprep.subr.mxu0 %v725
    %1056 = vmatpush1.msra.mxu0 %v724
    %1057 = vmatprep.subr.mxu0 %v733
    %1058 = vmatpush1.msra.mxu0 %v732
    %1059 = vmatprep.subr.mxu0 0.0
    %1060 = vmatpush1.msra.mxu0 0.0
    %1061 = vmatprep.subr.mxu0 0.0
    %1062 = vmatpush1.msra.mxu0 0.0
    %1063 = vmatprep.subr.mxu0 0.0
    %1064 = vmatpush1.msra.mxu0 0.0
    %1065 = vmatprep.subr.mxu0 0.0
    %1066 = vmatpush1.msra.mxu0 0.0
    %1067 = vmatprep.subr.mxu0 0.0
    %1068 = vmatpush1.msra.mxu0 0.0
    %1069 = vmatprep.subr.mxu0 0.0
    %1070 = vmatpush1.msra.mxu0 0.0
    %1071 = vmatprep.subr.mxu0 0.0
    %1072 = vmatpush1.msra.mxu0 0.0
    %1073 = vmatprep.subr.mxu0 0.0
    %1074 = vmatpush1.msra.mxu0 0.0
    %1075 = vmatprep.subr.mxu0 0.0
    %1076 = vmatpush1.msra.mxu0 0.0
    %1077 = vmatprep.subr.mxu0 0.0
    %1078 = vmatpush1.msra.mxu0 0.0
    %1079 = vmatprep.subr.mxu0 0.0
    %1080 = vmatpush1.msra.mxu0 0.0
    %1081 = vmatprep.subr.mxu0 0.0
    %1082 = vmatpush1.msra.mxu0 0.0
    %1083 = vmatprep.subr.mxu0 0.0
    %1084 = vmatpush1.msra.mxu0 0.0
    %1085 = vmatprep.subr.mxu0 0.0
    %1086 = vmatpush1.msra.mxu0 0.0
    %1087 = vmatprep.subr.mxu0 0.0
    %1088 = vmatpush1.msra.mxu0 0.0
    %1089 = vmatprep.subr.mxu0 0.0
    %1090 = vmatpush1.msra.mxu0 0.0
    %1091 = vmatprep.subr.mxu0 0.0
    %1092 = vmatpush1.msra.mxu0 0.0
    %1093 = vmatprep.subr.mxu0 0.0
    %1094 = vmatpush1.msra.mxu0 0.0
    %1095 = vmatprep.subr.mxu0 0.0
    %1096 = vmatpush1.msra.mxu0 0.0
    %1097 = vmatprep.subr.mxu0 0.0
    %1098 = vmatpush1.msra.mxu0 0.0
    %1099 = vmatprep.subr.mxu0 0.0
    %1100 = vmatpush1.msra.mxu0 0.0
    %1101 = vmatprep.subr.mxu0 0.0
    %1102 = vmatpush1.msra.mxu0 0.0
    %1103 = vmatprep.subr.mxu0 0.0
    %1104 = vmatpush1.msra.mxu0 0.0
    %1105 = vmatprep.subr.mxu0 0.0
    %1106 = vmatpush1.msra.mxu0 0.0
    %1107 = vmatprep.mubr.f32.mxu0 0.0
    %1108 = vmatmul.mubr.f32.gmra.mrb[0].mxu0 %v794
    %v1109 = vpop.f32.mrb[0].mxu0
    %v1110 = vadd.f32 %v755, %v1109
    %v1111 = vpop.f32.mrb[0].mxu0
    %v1112 = vadd.f32 %v755, %v1111
    %1113 = vmatprep.mubr.f32.mxu0 0.0
    %1114 = vmatmul.mubr.f32.gmra.mrb[0].mxu0 %v797
    %v1115 = vpop.f32.mrb[0].mxu0
    %v1116 = vadd.f32 %v760, %v1115
    %v1117 = vpop.f32.mrb[0].mxu0
    %v1118 = vadd.f32 %v760, %v1117
    %1119 = vmatprep.mubr.f32.mxu0 0.0
    %1120 = vmatmul.mubr.f32.gmra.mrb[0].mxu0 %v800
    %v1121 = vpop.f32.mrb[0].mxu0
    %v1122 = vadd.f32 %v765, %v1121
    %v1123 = vpop.f32.mrb[0].mxu0
    %v1124 = vadd.f32 %v765, %v1123
    %1125 = vmatprep.mubr.f32.mxu0 0.0
    %1126 = vmatmul.mubr.f32.gmra.mrb[0].mxu0 %v803
    %v1127 = vpop.f32.mrb[0].mxu0
    %v1128 = vadd.f32 %v770, %v1127
    %v1129 = vpop.f32.mrb[0].mxu0
    %v1130 = vadd.f32 %v770, %v1129
    %1131 = vmatprep.mubr.f32.mxu0 0.0
    %1132 = vmatmul.mubr.f32.gmra.mrb[0].mxu0 %v806
    %v1133 = vpop.f32.mrb[0].mxu0
    %v1134 = vadd.f32 %v775, %v1133
    %v1135 = vpop.f32.mrb[0].mxu0
    %v1136 = vadd.f32 %v775, %v1135
    %1137 = vmatprep.mubr.f32.mxu0 0.0
    %1138 = vmatmul.mubr.f32.gmra.mrb[0].mxu0 %v809
    %v1139 = vpop.f32.mrb[0].mxu0
    %v1140 = vadd.f32 %v780, %v1139
    %v1141 = vpop.f32.mrb[0].mxu0
    %v1142 = vadd.f32 %v780, %v1141
    %1143 = vmatprep.mubr.f32.mxu0 0.0
    %1144 = vmatmul.mubr.f32.gmra.mrb[0].mxu0 %v812
    %v1145 = vpop.f32.mrb[0].mxu0
    %v1146 = vadd.f32 %v785, %v1145
    %v1147 = vpop.f32.mrb[0].mxu0
    %v1148 = vadd.f32 %v785, %v1147
    %1149 = vmatprep.mubr.f32.mxu0 0.0
    %1150 = vmatmul.mubr.f32.gmra.mrb[0].mxu0 %v815
    %v1151 = vpop.f32.mrb[0].mxu0
    %v1152 = vadd.f32 %v790, %v1151
    %v1153 = vpop.f32.mrb[0].mxu0
    %v1154 = vadd.f32 %v790, %v1153
    %1155 = vdwg.mxu0
    %1156 = vmatprep.subr.mxu0 %v679
    %1157 = vmatpush1.msra.mxu0 %v678
    %1158 = vmatprep.subr.mxu0 %v687
    %1159 = vmatpush1.msra.mxu0 %v686
    %1160 = vmatprep.subr.mxu0 %v695
    %1161 = vmatpush1.msra.mxu0 %v694
    %1162 = vmatprep.subr.mxu0 %v703
    %1163 = vmatpush1.msra.mxu0 %v702
    %1164 = vmatprep.subr.mxu0 %v711
    %1165 = vmatpush1.msra.mxu0 %v710
    %1166 = vmatprep.subr.mxu0 %v719
    %1167 = vmatpush1.msra.mxu0 %v718
    %1168 = vmatprep.subr.mxu0 %v727
    %1169 = vmatpush1.msra.mxu0 %v726
    %1170 = vmatprep.subr.mxu0 %v735
    %1171 = vmatpush1.msra.mxu0 %v734
    %1172 = vmatprep.subr.mxu0 0.0
    %1173 = vmatpush1.msra.mxu0 0.0
    %1174 = vmatprep.subr.mxu0 0.0
    %1175 = vmatpush1.msra.mxu0 0.0
    %1176 = vmatprep.subr.mxu0 0.0
    %1177 = vmatpush1.msra.mxu0 0.0
    %1178 = vmatprep.subr.mxu0 0.0
    %1179 = vmatpush1.msra.mxu0 0.0
    %1180 = vmatprep.subr.mxu0 0.0
    %1181 = vmatpush1.msra.mxu0 0.0
    %1182 = vmatprep.subr.mxu0 0.0
    %1183 = vmatpush1.msra.mxu0 0.0
    %1184 = vmatprep.subr.mxu0 0.0
    %1185 = vmatpush1.msra.mxu0 0.0
    %1186 = vmatprep.subr.mxu0 0.0
    %1187 = vmatpush1.msra.mxu0 0.0
    %1188 = vmatprep.subr.mxu0 0.0
    %1189 = vmatpush1.msra.mxu0 0.0
    %1190 = vmatprep.subr.mxu0 0.0
    %1191 = vmatpush1.msra.mxu0 0.0
    %1192 = vmatprep.subr.mxu0 0.0
    %1193 = vmatpush1.msra.mxu0 0.0
    %1194 = vmatprep.subr.mxu0 0.0
    %1195 = vmatpush1.msra.mxu0 0.0
    %1196 = vmatprep.subr.mxu0 0.0
    %1197 = vmatpush1.msra.mxu0 0.0
    %1198 = vmatprep.subr.mxu0 0.0
    %1199 = vmatpush1.msra.mxu0 0.0
    %1200 = vmatprep.subr.mxu0 0.0
    %1201 = vmatpush1.msra.mxu0 0.0
    %1202 = vmatprep.subr.mxu0 0.0
    %1203 = vmatpush1.msra.mxu0 0.0
    %1204 = vmatprep.subr.mxu0 0.0
    %1205 = vmatpush1.msra.mxu0 0.0
    %1206 = vmatprep.subr.mxu0 0.0
    %1207 = vmatpush1.msra.mxu0 0.0
    %1208 = vmatprep.subr.mxu0 0.0
    %1209 = vmatpush1.msra.mxu0 0.0
    %1210 = vmatprep.subr.mxu0 0.0
    %1211 = vmatpush1.msra.mxu0 0.0
    %1212 = vmatprep.subr.mxu0 0.0
    %1213 = vmatpush1.msra.mxu0 0.0
    %1214 = vmatprep.subr.mxu0 0.0
    %1215 = vmatpush1.msra.mxu0 0.0
    %1216 = vmatprep.subr.mxu0 0.0
    %1217 = vmatpush1.msra.mxu0 0.0
    %1218 = vmatprep.subr.mxu0 0.0
    %1219 = vmatpush1.msra.mxu0 0.0
    %1220 = vmatprep.mubr.f32.mxu0 0.0
    %1221 = vmatmul.mubr.f32.gmra.mrb[0].mxu0 %v794
    %v1222 = vpop.f32.mrb[0].mxu0
    %v1223 = vadd.f32 %v755, %v1222
    %v1224 = vpop.f32.mrb[0].mxu0
    %v1225 = vadd.f32 %v755, %v1224
    %1226 = vmatprep.mubr.f32.mxu0 0.0
    %1227 = vmatmul.mubr.f32.gmra.mrb[0].mxu0 %v797
    %v1228 = vpop.f32.mrb[0].mxu0
    %v1229 = vadd.f32 %v760, %v1228
    %v1230 = vpop.f32.mrb[0].mxu0
    %v1231 = vadd.f32 %v760, %v1230
    %1232 = vmatprep.mubr.f32.mxu0 0.0
    %1233 = vmatmul.mubr.f32.gmra.mrb[0].mxu0 %v800
    %v1234 = vpop.f32.mrb[0].mxu0
    %v1235 = vadd.f32 %v765, %v1234
    %v1236 = vpop.f32.mrb[0].mxu0
    %v1237 = vadd.f32 %v765, %v1236
    %1238 = vmatprep.mubr.f32.mxu0 0.0
    %1239 = vmatmul.mubr.f32.gmra.mrb[0].mxu0 %v803
    %v1240 = vpop.f32.mrb[0].mxu0
    %v1241 = vadd.f32 %v770, %v1240
    %v1242 = vpop.f32.mrb[0].mxu0
    %v1243 = vadd.f32 %v770, %v1242
    %1244 = vmatprep.mubr.f32.mxu0 0.0
    %1245 = vmatmul.mubr.f32.gmra.mrb[0].mxu0 %v806
    %v1246 = vpop.f32.mrb[0].mxu0
    %v1247 = vadd.f32 %v775, %v1246
    %v1248 = vpop.f32.mrb[0].mxu0
    %v1249 = vadd.f32 %v775, %v1248
    %1250 = vmatprep.mubr.f32.mxu0 0.0
    %1251 = vmatmul.mubr.f32.gmra.mrb[0].mxu0 %v809
    %v1252 = vpop.f32.mrb[0].mxu0
    %v1253 = vadd.f32 %v780, %v1252
    %v1254 = vpop.f32.mrb[0].mxu0
    %v1255 = vadd.f32 %v780, %v1254
    %1256 = vmatprep.mubr.f32.mxu0 0.0
    %1257 = vmatmul.mubr.f32.gmra.mrb[0].mxu0 %v812
    %v1258 = vpop.f32.mrb[0].mxu0
    %v1259 = vadd.f32 %v785, %v1258
    %v1260 = vpop.f32.mrb[0].mxu0
    %v1261 = vadd.f32 %v785, %v1260
    %1262 = vmatprep.mubr.f32.mxu0 0.0
    %1263 = vmatmul.mubr.f32.gmra.mrb[0].mxu0 %v815
    %v1264 = vpop.f32.mrb[0].mxu0
    %v1265 = vadd.f32 %v790, %v1264
    %v1266 = vpop.f32.mrb[0].mxu0
    %v1267 = vadd.f32 %v790, %v1266
    %1268 = vdwg.mxu0
    %v1269 = vmax.f32 %v884, 0.0
    %v1270 = vmax.f32 %v886, 0.0
    %v1271 = vmax.f32 %v997, 0.0
    %v1272 = vmax.f32 %v999, 0.0
    %v1273 = vmax.f32 %v1110, 0.0
    %v1274 = vmax.f32 %v1112, 0.0
    %v1275 = vmax.f32 %v1223, 0.0
    %v1276 = vmax.f32 %v1225, 0.0
    %v1277 = vmax.f32 %v890, 0.0
    %v1278 = vmax.f32 %v892, 0.0
    %v1279 = vmax.f32 %v1003, 0.0
    %v1280 = vmax.f32 %v1005, 0.0
    %v1281 = vmax.f32 %v1116, 0.0
    %v1282 = vmax.f32 %v1118, 0.0
    %v1283 = vmax.f32 %v1229, 0.0
    %v1284 = vmax.f32 %v1231, 0.0
    %v1285 = vmax.f32 %v896, 0.0
    %v1286 = vmax.f32 %v898, 0.0
    %v1287 = vmax.f32 %v1009, 0.0
    %v1288 = vmax.f32 %v1011, 0.0
    %v1289 = vmax.f32 %v1122, 0.0
    %v1290 = vmax.f32 %v1124, 0.0
    %v1291 = vmax.f32 %v1235, 0.0
    %v1292 = vmax.f32 %v1237, 0.0
    %v1293 = vmax.f32 %v902, 0.0
    %v1294 = vmax.f32 %v904, 0.0
    %v1295 = vmax.f32 %v1015, 0.0
    %v1296 = vmax.f32 %v1017, 0.0
    %v1297 = vmax.f32 %v1128, 0.0
    %v1298 = vmax.f32 %v1130, 0.0
    %v1299 = vmax.f32 %v1241, 0.0
    %v1300 = vmax.f32 %v1243, 0.0
    %v1301 = vmax.f32 %v908, 0.0
    %v1302 = vmax.f32 %v910, 0.0
    %v1303 = vmax.f32 %v1021, 0.0
    %v1304 = vmax.f32 %v1023, 0.0
    %v1305 = vmax.f32 %v1134, 0.0
    %v1306 = vmax.f32 %v1136, 0.0
    %v1307 = vmax.f32 %v1247, 0.0
    %v1308 = vmax.f32 %v1249, 0.0
    %v1309 = vmax.f32 %v914, 0.0
    %v1310 = vmax.f32 %v916, 0.0
    %v1311 = vmax.f32 %v1027, 0.0
    %v1312 = vmax.f32 %v1029, 0.0
    %v1313 = vmax.f32 %v1140, 0.0
    %v1314 = vmax.f32 %v1142, 0.0
    %v1315 = vmax.f32 %v1253, 0.0
    %v1316 = vmax.f32 %v1255, 0.0
    %v1317 = vmax.f32 %v920, 0.0
    %v1318 = vmax.f32 %v922, 0.0
    %v1319 = vmax.f32 %v1033, 0.0
    %v1320 = vmax.f32 %v1035, 0.0
    %v1321 = vmax.f32 %v1146, 0.0
    %v1322 = vmax.f32 %v1148, 0.0
    %v1323 = vmax.f32 %v1259, 0.0
    %v1324 = vmax.f32 %v1261, 0.0
    %v1325 = vmax.f32 %v926, 0.0
    %v1326 = vmax.f32 %v928, 0.0
    %v1327 = vmax.f32 %v1039, 0.0
    %v1328 = vmax.f32 %v1041, 0.0
    %v1329 = vmax.f32 %v1152, 0.0
    %v1330 = vmax.f32 %v1154, 0.0
    %v1331 = vmax.f32 %v1265, 0.0
    %v1332 = vmax.f32 %v1267, 0.0
    %v1333 = vld [vmem:[#allocation2 + $0x120] sm:$0xff]
    %v1334 = vld [vmem:[#allocation2 + $0x128] sm:$0xff]
    %v1335 = vld [vmem:[#allocation2 + $0x130] sm:$0xff]
    %v1336 = vld [vmem:[#allocation2 + $0x138] sm:$0xff]
    %1338 = vset.pattern.permute.xlu0 0
    %1339 = vperm.xlu0 %1338, %v1335
    %v1340 = vpop.permute.xlu0 %1339
    %1343 = vset.pattern.permute.xlu0 0
    %1344 = vperm.xlu0 %1343, %v1336
    %v1345 = vpop.permute.xlu0 %1344
    %v1348 = vsel %vm792, %v1333, 0
    %v1351 = vsel %vm792, %v1334, 0
    %1353 = vmatprep.subr.mxu0 %v1270
    %1354 = vmatpush1.msra.mxu0 %v1269
    %1355 = vmatprep.subr.mxu0 %v1278
    %1356 = vmatpush1.msra.mxu0 %v1277
    %1357 = vmatprep.subr.mxu0 %v1286
    %1358 = vmatpush1.msra.mxu0 %v1285
    %1359 = vmatprep.subr.mxu0 %v1294
    %1360 = vmatpush1.msra.mxu0 %v1293
    %1361 = vmatprep.subr.mxu0 %v1302
    %1362 = vmatpush1.msra.mxu0 %v1301
    %1363 = vmatprep.subr.mxu0 %v1310
    %1364 = vmatpush1.msra.mxu0 %v1309
    %1365 = vmatprep.subr.mxu0 %v1318
    %1366 = vmatpush1.msra.mxu0 %v1317
    %1367 = vmatprep.subr.mxu0 %v1326
    %1368 = vmatpush1.msra.mxu0 %v1325
    %1369 = vmatprep.subr.mxu0 0.0
    %1370 = vmatpush1.msra.mxu0 0.0
    %1371 = vmatprep.subr.mxu0 0.0
    %1372 = vmatpush1.msra.mxu0 0.0
    %1373 = vmatprep.subr.mxu0 0.0
    %1374 = vmatpush1.msra.mxu0 0.0
    %1375 = vmatprep.subr.mxu0 0.0
    %1376 = vmatpush1.msra.mxu0 0.0
    %1377 = vmatprep.subr.mxu0 0.0
    %1378 = vmatpush1.msra.mxu0 0.0
    %1379 = vmatprep.subr.mxu0 0.0
    %1380 = vmatpush1.msra.mxu0 0.0
    %1381 = vmatprep.subr.mxu0 0.0
    %1382 = vmatpush1.msra.mxu0 0.0
    %1383 = vmatprep.subr.mxu0 0.0
    %1384 = vmatpush1.msra.mxu0 0.0
    %1385 = vmatprep.subr.mxu0 0.0
    %1386 = vmatpush1.msra.mxu0 0.0
    %1387 = vmatprep.subr.mxu0 0.0
    %1388 = vmatpush1.msra.mxu0 0.0
    %1389 = vmatprep.subr.mxu0 0.0
    %1390 = vmatpush1.msra.mxu0 0.0
    %1391 = vmatprep.subr.mxu0 0.0
    %1392 = vmatpush1.msra.mxu0 0.0
    %1393 = vmatprep.subr.mxu0 0.0
    %1394 = vmatpush1.msra.mxu0 0.0
    %1395 = vmatprep.subr.mxu0 0.0
    %1396 = vmatpush1.msra.mxu0 0.0
    %1397 = vmatprep.subr.mxu0 0.0
    %1398 = vmatpush1.msra.mxu0 0.0
    %1399 = vmatprep.subr.mxu0 0.0
    %1400 = vmatpush1.msra.mxu0 0.0
    %1401 = vmatprep.subr.mxu0 0.0
    %1402 = vmatpush1.msra.mxu0 0.0
    %1403 = vmatprep.subr.mxu0 0.0
    %1404 = vmatpush1.msra.mxu0 0.0
    %1405 = vmatprep.subr.mxu0 0.0
    %1406 = vmatpush1.msra.mxu0 0.0
    %1407 = vmatprep.subr.mxu0 0.0
    %1408 = vmatpush1.msra.mxu0 0.0
    %1409 = vmatprep.subr.mxu0 0.0
    %1410 = vmatpush1.msra.mxu0 0.0
    %1411 = vmatprep.subr.mxu0 0.0
    %1412 = vmatpush1.msra.mxu0 0.0
    %1413 = vmatprep.subr.mxu0 0.0
    %1414 = vmatpush1.msra.mxu0 0.0
    %1415 = vmatprep.subr.mxu0 0.0
    %1416 = vmatpush1.msra.mxu0 0.0
    %1417 = vmatprep.mubr.f32.mxu0 0.0
    %1418 = vmatmul.mubr.f32.gmra.mrb[0].mxu0 %v1348
    %v1419 = vpop.f32.mrb[0].mxu0
    %v1420 = vadd.f32 %v1340, %v1419
    %v1421 = vpop.f32.mrb[0].mxu0
    %v1422 = vadd.f32 %v1340, %v1421
    %1423 = vmatprep.mubr.f32.mxu0 0.0
    %1424 = vmatmul.mubr.f32.gmra.mrb[0].mxu0 %v1351
    %v1425 = vpop.f32.mrb[0].mxu0
    %v1426 = vadd.f32 %v1345, %v1425
    %v1427 = vpop.f32.mrb[0].mxu0
    %v1428 = vadd.f32 %v1345, %v1427
    %1429 = vdwg.mxu0
    %1430 = vmatprep.subr.mxu0 %v1272
    %1431 = vmatpush1.msra.mxu0 %v1271
    %1432 = vmatprep.subr.mxu0 %v1280
    %1433 = vmatpush1.msra.mxu0 %v1279
    %1434 = vmatprep.subr.mxu0 %v1288
    %1435 = vmatpush1.msra.mxu0 %v1287
    %1436 = vmatprep.subr.mxu0 %v1296
    %1437 = vmatpush1.msra.mxu0 %v1295
    %1438 = vmatprep.subr.mxu0 %v1304
    %1439 = vmatpush1.msra.mxu0 %v1303
    %1440 = vmatprep.subr.mxu0 %v1312
    %1441 = vmatpush1.msra.mxu0 %v1311
    %1442 = vmatprep.subr.mxu0 %v1320
    %1443 = vmatpush1.msra.mxu0 %v1319
    %1444 = vmatprep.subr.mxu0 %v1328
    %1445 = vmatpush1.msra.mxu0 %v1327
    %1446 = vmatprep.subr.mxu0 0.0
    %1447 = vmatpush1.msra.mxu0 0.0
    %1448 = vmatprep.subr.mxu0 0.0
    %1449 = vmatpush1.msra.mxu0 0.0
    %1450 = vmatprep.subr.mxu0 0.0
    %1451 = vmatpush1.msra.mxu0 0.0
    %1452 = vmatprep.subr.mxu0 0.0
    %1453 = vmatpush1.msra.mxu0 0.0
    %1454 = vmatprep.subr.mxu0 0.0
    %1455 = vmatpush1.msra.mxu0 0.0
    %1456 = vmatprep.subr.mxu0 0.0
    %1457 = vmatpush1.msra.mxu0 0.0
    %1458 = vmatprep.subr.mxu0 0.0
    %1459 = vmatpush1.msra.mxu0 0.0
    %1460 = vmatprep.subr.mxu0 0.0
    %1461 = vmatpush1.msra.mxu0 0.0
    %1462 = vmatprep.subr.mxu0 0.0
    %1463 = vmatpush1.msra.mxu0 0.0
    %1464 = vmatprep.subr.mxu0 0.0
    %1465 = vmatpush1.msra.mxu0 0.0
    %1466 = vmatprep.subr.mxu0 0.0
    %1467 = vmatpush1.msra.mxu0 0.0
    %1468 = vmatprep.subr.mxu0 0.0
    %1469 = vmatpush1.msra.mxu0 0.0
    %1470 = vmatprep.subr.mxu0 0.0
    %1471 = vmatpush1.msra.mxu0 0.0
    %1472 = vmatprep.subr.mxu0 0.0
    %1473 = vmatpush1.msra.mxu0 0.0
    %1474 = vmatprep.subr.mxu0 0.0
    %1475 = vmatpush1.msra.mxu0 0.0
    %1476 = vmatprep.subr.mxu0 0.0
    %1477 = vmatpush1.msra.mxu0 0.0
    %1478 = vmatprep.subr.mxu0 0.0
    %1479 = vmatpush1.msra.mxu0 0.0
    %1480 = vmatprep.subr.mxu0 0.0
    %1481 = vmatpush1.msra.mxu0 0.0
    %1482 = vmatprep.subr.mxu0 0.0
    %1483 = vmatpush1.msra.mxu0 0.0
    %1484 = vmatprep.subr.mxu0 0.0
    %1485 = vmatpush1.msra.mxu0 0.0
    %1486 = vmatprep.subr.mxu0 0.0
    %1487 = vmatpush1.msra.mxu0 0.0
    %1488 = vmatprep.subr.mxu0 0.0
    %1489 = vmatpush1.msra.mxu0 0.0
    %1490 = vmatprep.subr.mxu0 0.0
    %1491 = vmatpush1.msra.mxu0 0.0
    %1492 = vmatprep.subr.mxu0 0.0
    %1493 = vmatpush1.msra.mxu0 0.0
    %1494 = vmatprep.mubr.f32.mxu0 0.0
    %1495 = vmatmul.mubr.f32.gmra.mrb[0].mxu0 %v1348
    %v1496 = vpop.f32.mrb[0].mxu0
    %v1497 = vadd.f32 %v1340, %v1496
    %v1498 = vpop.f32.mrb[0].mxu0
    %v1499 = vadd.f32 %v1340, %v1498
    %1500 = vmatprep.mubr.f32.mxu0 0.0
    %1501 = vmatmul.mubr.f32.gmra.mrb[0].mxu0 %v1351
    %v1502 = vpop.f32.mrb[0].mxu0
    %v1503 = vadd.f32 %v1345, %v1502
    %v1504 = vpop.f32.mrb[0].mxu0
    %v1505 = vadd.f32 %v1345, %v1504
    %1506 = vdwg.mxu0
    %1507 = vmatprep.subr.mxu0 %v1274
    %1508 = vmatpush1.msra.mxu0 %v1273
    %1509 = vmatprep.subr.mxu0 %v1282
    %1510 = vmatpush1.msra.mxu0 %v1281
    %1511 = vmatprep.subr.mxu0 %v1290
    %1512 = vmatpush1.msra.mxu0 %v1289
    %1513 = vmatprep.subr.mxu0 %v1298
    %1514 = vmatpush1.msra.mxu0 %v1297
    %1515 = vmatprep.subr.mxu0 %v1306
    %1516 = vmatpush1.msra.mxu0 %v1305
    %1517 = vmatprep.subr.mxu0 %v1314
    %1518 = vmatpush1.msra.mxu0 %v1313
    %1519 = vmatprep.subr.mxu0 %v1322
    %1520 = vmatpush1.msra.mxu0 %v1321
    %1521 = vmatprep.subr.mxu0 %v1330
    %1522 = vmatpush1.msra.mxu0 %v1329
    %1523 = vmatprep.subr.mxu0 0.0
    %1524 = vmatpush1.msra.mxu0 0.0
    %1525 = vmatprep.subr.mxu0 0.0
    %1526 = vmatpush1.msra.mxu0 0.0
    %1527 = vmatprep.subr.mxu0 0.0
    %1528 = vmatpush1.msra.mxu0 0.0
    %1529 = vmatprep.subr.mxu0 0.0
    %1530 = vmatpush1.msra.mxu0 0.0
    %1531 = vmatprep.subr.mxu0 0.0
    %1532 = vmatpush1.msra.mxu0 0.0
    %1533 = vmatprep.subr.mxu0 0.0
    %1534 = vmatpush1.msra.mxu0 0.0
    %1535 = vmatprep.subr.mxu0 0.0
    %1536 = vmatpush1.msra.mxu0 0.0
    %1537 = vmatprep.subr.mxu0 0.0
    %1538 = vmatpush1.msra.mxu0 0.0
    %1539 = vmatprep.subr.mxu0 0.0
    %1540 = vmatpush1.msra.mxu0 0.0
    %1541 = vmatprep.subr.mxu0 0.0
    %1542 = vmatpush1.msra.mxu0 0.0
    %1543 = vmatprep.subr.mxu0 0.0
    %1544 = vmatpush1.msra.mxu0 0.0
    %1545 = vmatprep.subr.mxu0 0.0
    %1546 = vmatpush1.msra.mxu0 0.0
    %1547 = vmatprep.subr.mxu0 0.0
    %1548 = vmatpush1.msra.mxu0 0.0
    %1549 = vmatprep.subr.mxu0 0.0
    %1550 = vmatpush1.msra.mxu0 0.0
    %1551 = vmatprep.subr.mxu0 0.0
    %1552 = vmatpush1.msra.mxu0 0.0
    %1553 = vmatprep.subr.mxu0 0.0
    %1554 = vmatpush1.msra.mxu0 0.0
    %1555 = vmatprep.subr.mxu0 0.0
    %1556 = vmatpush1.msra.mxu0 0.0
    %1557 = vmatprep.subr.mxu0 0.0
    %1558 = vmatpush1.msra.mxu0 0.0
    %1559 = vmatprep.subr.mxu0 0.0
    %1560 = vmatpush1.msra.mxu0 0.0
    %1561 = vmatprep.subr.mxu0 0.0
    %1562 = vmatpush1.msra.mxu0 0.0
    %1563 = vmatprep.subr.mxu0 0.0
    %1564 = vmatpush1.msra.mxu0 0.0
    %1565 = vmatprep.subr.mxu0 0.0
    %1566 = vmatpush1.msra.mxu0 0.0
    %1567 = vmatprep.subr.mxu0 0.0
    %1568 = vmatpush1.msra.mxu0 0.0
    %1569 = vmatprep.subr.mxu0 0.0
    %1570 = vmatpush1.msra.mxu0 0.0
    %1571 = vmatprep.mubr.f32.mxu0 0.0
    %1572 = vmatmul.mubr.f32.gmra.mrb[0].mxu0 %v1348
    %v1573 = vpop.f32.mrb[0].mxu0
    %v1574 = vadd.f32 %v1340, %v1573
    %v1575 = vpop.f32.mrb[0].mxu0
    %v1576 = vadd.f32 %v1340, %v1575
    %1577 = vmatprep.mubr.f32.mxu0 0.0
    %1578 = vmatmul.mubr.f32.gmra.mrb[0].mxu0 %v1351
    %v1579 = vpop.f32.mrb[0].mxu0
    %v1580 = vadd.f32 %v1345, %v1579
    %v1581 = vpop.f32.mrb[0].mxu0
    %v1582 = vadd.f32 %v1345, %v1581
    %1583 = vdwg.mxu0
    %1584 = vmatprep.subr.mxu0 %v1276
    %1585 = vmatpush1.msra.mxu0 %v1275
    %1586 = vmatprep.subr.mxu0 %v1284
    %1587 = vmatpush1.msra.mxu0 %v1283
    %1588 = vmatprep.subr.mxu0 %v1292
    %1589 = vmatpush1.msra.mxu0 %v1291
    %1590 = vmatprep.subr.mxu0 %v1300
    %1591 = vmatpush1.msra.mxu0 %v1299
    %1592 = vmatprep.subr.mxu0 %v1308
    %1593 = vmatpush1.msra.mxu0 %v1307
    %1594 = vmatprep.subr.mxu0 %v1316
    %1595 = vmatpush1.msra.mxu0 %v1315
    %1596 = vmatprep.subr.mxu0 %v1324
    %1597 = vmatpush1.msra.mxu0 %v1323
    %1598 = vmatprep.subr.mxu0 %v1332
    %1599 = vmatpush1.msra.mxu0 %v1331
    %1600 = vmatprep.subr.mxu0 0.0
    %1601 = vmatpush1.msra.mxu0 0.0
    %1602 = vmatprep.subr.mxu0 0.0
    %1603 = vmatpush1.msra.mxu0 0.0
    %1604 = vmatprep.subr.mxu0 0.0
    %1605 = vmatpush1.msra.mxu0 0.0
    %1606 = vmatprep.subr.mxu0 0.0
    %1607 = vmatpush1.msra.mxu0 0.0
    %1608 = vmatprep.subr.mxu0 0.0
    %1609 = vmatpush1.msra.mxu0 0.0
    %1610 = vmatprep.subr.mxu0 0.0
    %1611 = vmatpush1.msra.mxu0 0.0
    %1612 = vmatprep.subr.mxu0 0.0
    %1613 = vmatpush1.msra.mxu0 0.0
    %1614 = vmatprep.subr.mxu0 0.0
    %1615 = vmatpush1.msra.mxu0 0.0
    %1616 = vmatprep.subr.mxu0 0.0
    %1617 = vmatpush1.msra.mxu0 0.0
    %1618 = vmatprep.subr.mxu0 0.0
    %1619 = vmatpush1.msra.mxu0 0.0
    %1620 = vmatprep.subr.mxu0 0.0
    %1621 = vmatpush1.msra.mxu0 0.0
    %1622 = vmatprep.subr.mxu0 0.0
    %1623 = vmatpush1.msra.mxu0 0.0
    %1624 = vmatprep.subr.mxu0 0.0
    %1625 = vmatpush1.msra.mxu0 0.0
    %1626 = vmatprep.subr.mxu0 0.0
    %1627 = vmatpush1.msra.mxu0 0.0
    %1628 = vmatprep.subr.mxu0 0.0
    %1629 = vmatpush1.msra.mxu0 0.0
    %1630 = vmatprep.subr.mxu0 0.0
    %1631 = vmatpush1.msra.mxu0 0.0
    %1632 = vmatprep.subr.mxu0 0.0
    %1633 = vmatpush1.msra.mxu0 0.0
    %1634 = vmatprep.subr.mxu0 0.0
    %1635 = vmatpush1.msra.mxu0 0.0
    %1636 = vmatprep.subr.mxu0 0.0
    %1637 = vmatpush1.msra.mxu0 0.0
    %1638 = vmatprep.subr.mxu0 0.0
    %1639 = vmatpush1.msra.mxu0 0.0
    %1640 = vmatprep.subr.mxu0 0.0
    %1641 = vmatpush1.msra.mxu0 0.0
    %1642 = vmatprep.subr.mxu0 0.0
    %1643 = vmatpush1.msra.mxu0 0.0
    %1644 = vmatprep.subr.mxu0 0.0
    %1645 = vmatpush1.msra.mxu0 0.0
    %1646 = vmatprep.subr.mxu0 0.0
    %1647 = vmatpush1.msra.mxu0 0.0
    %1648 = vmatprep.mubr.f32.mxu0 0.0
    %1649 = vmatmul.mubr.f32.gmra.mrb[0].mxu0 %v1348
    %v1650 = vpop.f32.mrb[0].mxu0
    %v1651 = vadd.f32 %v1340, %v1650
    %v1652 = vpop.f32.mrb[0].mxu0
    %v1653 = vadd.f32 %v1340, %v1652
    %1654 = vmatprep.mubr.f32.mxu0 0.0
    %1655 = vmatmul.mubr.f32.gmra.mrb[0].mxu0 %v1351
    %v1656 = vpop.f32.mrb[0].mxu0
    %v1657 = vadd.f32 %v1345, %v1656
    %v1658 = vpop.f32.mrb[0].mxu0
    %v1659 = vadd.f32 %v1345, %v1658
    %1660 = vdwg.mxu0
    %v1661 = vmax.f32 %v1420, 0.0
    %v1662 = vmax.f32 %v1422, 0.0
    %v1663 = vmax.f32 %v1497, 0.0
    %v1664 = vmax.f32 %v1499, 0.0
    %v1665 = vmax.f32 %v1574, 0.0
    %v1666 = vmax.f32 %v1576, 0.0
    %v1667 = vmax.f32 %v1651, 0.0
    %v1668 = vmax.f32 %v1653, 0.0
    %v1669 = vmax.f32 %v1426, 0.0
    %v1670 = vmax.f32 %v1428, 0.0
    %v1671 = vmax.f32 %v1503, 0.0
    %v1672 = vmax.f32 %v1505, 0.0
    %v1673 = vmax.f32 %v1580, 0.0
    %v1674 = vmax.f32 %v1582, 0.0
    %v1675 = vmax.f32 %v1657, 0.0
    %v1676 = vmax.f32 %v1659, 0.0
    %v1677 = vld [vmem:[#allocation2 + $0x140] sm:$0xff]
    %v1678 = vld [vmem:[#allocation2 + $0x148] sm:$0xff]
    %v1679 = vld [vmem:[#allocation2 + $0x150] sm:$0x1]
    %1681 = vset.pattern.permute.xlu0 0
    %1682 = vperm.xlu0 %1681, %v1677
    %v1683 = vpop.permute.xlu0 %1682
    %1686 = vset.pattern.permute.xlu0 0
    %1687 = vperm.xlu0 %1686, %v1678
    %v1688 = vpop.permute.xlu0 %1687
    %v1690 = vmul.f32 %v1683, %v1661
    %v1691 = vmul.f32 %v1683, %v1662
    %v1692 = vmul.f32 %v1683, %v1663
    %v1693 = vmul.f32 %v1683, %v1664
    %v1694 = vmul.f32 %v1683, %v1665
    %v1695 = vmul.f32 %v1683, %v1666
    %v1696 = vmul.f32 %v1683, %v1667
    %v1697 = vmul.f32 %v1683, %v1668
    %v1698 = vmul.f32 %v1688, %v1669
    %v1699 = vmul.f32 %v1688, %v1670
    %v1700 = vmul.f32 %v1688, %v1671
    %v1701 = vmul.f32 %v1688, %v1672
    %v1702 = vmul.f32 %v1688, %v1673
    %v1703 = vmul.f32 %v1688, %v1674
    %v1704 = vmul.f32 %v1688, %v1675
    %v1705 = vmul.f32 %v1688, %v1676
    %v1706 = vadd.f32 %v1690, %v1698
    %v1707 = vrot.slane %v1706, 4
    %v1708 = vadd.f32 %v1706, %v1707
    %v1709 = vrot.slane %v1708, 2
    %v1710 = vadd.f32 %v1708, %v1709
    %v1711 = vrot.slane %v1710, 1
    %v1712 = vadd.f32 %v1710, %v1711
    %v1713 = vadd.f32 %v1691, %v1699
    %v1714 = vrot.slane %v1713, 4
    %v1715 = vadd.f32 %v1713, %v1714
    %v1716 = vrot.slane %v1715, 2
    %v1717 = vadd.f32 %v1715, %v1716
    %v1718 = vrot.slane %v1717, 1
    %v1719 = vadd.f32 %v1717, %v1718
    %v1720 = vadd.f32 %v1692, %v1700
    %v1721 = vrot.slane %v1720, 4
    %v1722 = vadd.f32 %v1720, %v1721
    %v1723 = vrot.slane %v1722, 2
    %v1724 = vadd.f32 %v1722, %v1723
    %v1725 = vrot.slane %v1724, 1
    %v1726 = vadd.f32 %v1724, %v1725
    %v1727 = vadd.f32 %v1693, %v1701
    %v1728 = vrot.slane %v1727, 4
    %v1729 = vadd.f32 %v1727, %v1728
    %v1730 = vrot.slane %v1729, 2
    %v1731 = vadd.f32 %v1729, %v1730
    %v1732 = vrot.slane %v1731, 1
    %v1733 = vadd.f32 %v1731, %v1732
    %v1734 = vadd.f32 %v1694, %v1702
    %v1735 = vrot.slane %v1734, 4
    %v1736 = vadd.f32 %v1734, %v1735
    %v1737 = vrot.slane %v1736, 2
    %v1738 = vadd.f32 %v1736, %v1737
    %v1739 = vrot.slane %v1738, 1
    %v1740 = vadd.f32 %v1738, %v1739
    %v1741 = vadd.f32 %v1695, %v1703
    %v1742 = vrot.slane %v1741, 4
    %v1743 = vadd.f32 %v1741, %v1742
    %v1744 = vrot.slane %v1743, 2
    %v1745 = vadd.f32 %v1743, %v1744
    %v1746 = vrot.slane %v1745, 1
    %v1747 = vadd.f32 %v1745, %v1746
    %v1748 = vadd.f32 %v1696, %v1704
    %v1749 = vrot.slane %v1748, 4
    %v1750 = vadd.f32 %v1748, %v1749
    %v1751 = vrot.slane %v1750, 2
    %v1752 = vadd.f32 %v1750, %v1751
    %v1753 = vrot.slane %v1752, 1
    %v1754 = vadd.f32 %v1752, %v1753
    %v1755 = vadd.f32 %v1697, %v1705
    %v1756 = vrot.slane %v1755, 4
    %v1757 = vadd.f32 %v1755, %v1756
    %v1758 = vrot.slane %v1757, 2
    %v1759 = vadd.f32 %v1757, %v1758
    %v1760 = vrot.slane %v1759, 1
    %v1761 = vadd.f32 %v1759, %v1760
    %1763 = vset.pattern.permute.xlu0 0
    %1764 = vperm.xlu0 %1763, %v1679
    %v1765 = vpop.permute.xlu0 %1764
    %v1767 = vadd.f32 %v1712, %v1765
    %v1768 = vadd.f32 %v1719, %v1765
    %v1769 = vadd.f32 %v1726, %v1765
    %v1770 = vadd.f32 %v1733, %v1765
    %v1771 = vadd.f32 %v1740, %v1765
    %v1772 = vadd.f32 %v1747, %v1765
    %v1773 = vadd.f32 %v1754, %v1765
    %v1774 = vadd.f32 %v1761, %v1765
    %v1775 = vld [vmem:[#allocation2 + $0x158] sm:$0x1]
    %v1776 = vld [vmem:[#allocation2 + $0x160] sm:$0x1]
    %1778 = vset.pattern.permute.xlu0 0
    %1779 = vperm.xlu0 %1778, %v1775
    %v1780 = vpop.permute.xlu0 %1779
    %v1782 = vmul.f32 %v1780, %v44
    %v1783 = vmul.f32 %v1780, %v48
    %v1784 = vmul.f32 %v1780, %v52
    %v1785 = vmul.f32 %v1780, %v56
    %v1786 = vmul.f32 %v1780, %v60
    %v1787 = vmul.f32 %v1780, %v64
    %v1788 = vmul.f32 %v1780, %v68
    %v1789 = vmul.f32 %v1780, %v72
    %1791 = vset.pattern.permute.xlu0 0
    %1792 = vperm.xlu0 %1791, %v1776
    %v1793 = vpop.permute.xlu0 %1792
    %v1795 = vadd.f32 %v1782, %v1793
    %v1796 = vadd.f32 %v1783, %v1793
    %v1797 = vadd.f32 %v1784, %v1793
    %v1798 = vadd.f32 %v1785, %v1793
    %v1799 = vadd.f32 %v1786, %v1793
    %v1800 = vadd.f32 %v1787, %v1793
    %v1801 = vadd.f32 %v1788, %v1793
    %v1802 = vadd.f32 %v1789, %v1793
    %v1803 = vadd.f32 %v1795, %v1767
    %v1804 = vadd.f32 %v1796, %v1768
    %v1805 = vadd.f32 %v1797, %v1769
    %v1806 = vadd.f32 %v1798, %v1770
    %v1807 = vadd.f32 %v1799, %v1771
    %v1808 = vadd.f32 %v1800, %v1772
    %v1809 = vadd.f32 %v1801, %v1773
    %v1810 = vadd.f32 %v1802, %v1774
    %v1819 = vcombine.low %v1803, %v1804
    %v1820 = vcombine.low %v1805, %v1806
    %v1821 = vcombine.low %v1807, %v1808
    %v1822 = vcombine.low %v1809, %v1810
    %v1824 = vunpack.c.l.s4 1966171168
    %v1825 = vunpack.c.0.s8 %v1824
    %v1826 = vlaneseq
    %v1827 = vshrl.u32 %v1826, 7
    %v1828 = vsub.s32 %v1825, %v1827
    %v1829 = vrot.slane %v1819, %v1828
    %v1831 = vunpack.c.l.s4 1966171168
    %v1832 = vunpack.c.0.s8 %v1831
    %v1833 = vlaneseq
    %v1834 = vshrl.u32 %v1833, 7
    %v1835 = vsub.s32 %v1832, %v1834
    %v1836 = vrot.slane %v1820, %v1835
    %v1838 = vunpack.c.l.s4 1966171168
    %v1839 = vunpack.c.0.s8 %v1838
    %v1840 = vlaneseq
    %v1841 = vshrl.u32 %v1840, 7
    %v1842 = vsub.s32 %v1839, %v1841
    %v1843 = vrot.slane %v1821, %v1842
    %v1845 = vunpack.c.l.s4 1966171168
    %v1846 = vunpack.c.0.s8 %v1845
    %v1847 = vlaneseq
    %v1848 = vshrl.u32 %v1847, 7
    %v1849 = vsub.s32 %v1846, %v1848
    %v1850 = vrot.slane %v1822, %v1849
    %v1851 = vcombine.low %v1829, %v1836
    %v1852 = vcombine.low %v1843, %v1850
    %v1854 = vunpack.c.l.s4 1966171168
    %v1855 = vunpack.c.0.s8 %v1854
    %v1856 = vlaneseq
    %v1857 = vshrl.u32 %v1856, 7
    %v1858 = vsub.s32 %v1855, %v1857
    %v1859 = vrot.slane %v1851, %v1858
    %v1861 = vunpack.c.l.s4 1966171168
    %v1862 = vunpack.c.0.s8 %v1861
    %v1863 = vlaneseq
    %v1864 = vshrl.u32 %v1863, 7
    %v1865 = vsub.s32 %v1862, %v1864
    %v1866 = vrot.slane %v1852, %v1865
    %v1867 = vcombine.low %v1859, %v1866
    %1869 = vst [vmem:[%s2] sm:$0xff] %v1867
    // Predicated region
    $region14: #{_combine_nd.1} parent=1 // pred_check
      _
    $region15: #{_combine_nd.1} parent=1 // pred_check_branch
      %1871 = sbr.rel (0) target = $region17
    $region16: #{_combine_nd.1} parent=1 // pred_region
      _
    $region17: #{_combine_nd.1} parent=1 // pred_fallthru
      _
    // Predicated region
    $region18: #{_combine_nd.1} parent=1 // pred_check
      _
    $region19: #{_combine_nd.1} parent=1 // pred_check_branch
      %1873 = sbr.rel (0) target = $region21
    $region20: #{_combine_nd.1} parent=1 // pred_region
      _
    $region21: #{_combine_nd.1} parent=1 // pred_fallthru
      _
    %1874 = vsyncpa [#allocation3], 1

</llo_original>
